<compile_context>
chip_gen: v7x
topology: tpu7x:2x2x1
jax: 0.10.0
libtpu: 0.0.40
codegen_flags: <defaults>
</compile_context>

<pallas_src>
import math
import functools

import jax
import jax.numpy as jnp
import numpy as np
from jax.experimental import pallas as pl
from jax.experimental.pallas import tpu as pltpu


def _attention_kernel(kv_ref, q_ref, wkv_ref, wq_ref, wfr_ref, wfa_ref,
                      vecs_ref, out_ref, attn_ref, *, h, eps):
    # Block shapes:
    #   kv_ref   : (2, 1, Sk, H)   stacked [key, value] for this batch element
    #   q_ref    : (1, Sq, H)      query (also the residual)
    #   wkv_ref  : (2h, H, dh)     per-head K/V projection weights (x @ w form)
    #   wq_ref   : (h, H, dh)      per-head Q weights, 1/sqrt(dh) pre-folded
    #   wfr_ref  : (H, H)          residual half of final linear (transposed)
    #   wfa_ref  : (h, dh, H)      attention half of final linear, per head
    #   vecs_ref : (3, H)          [bf, gamma, beta]
    #   out_ref  : (1, Sq, H)
    #   attn_ref : (h, 1, Sq, Sk)
    Sk, H = kv_ref.shape[2], kv_ref.shape[3]
    Sq = q_ref.shape[1]
    dh = wq_ref.shape[2]

    kv = kv_ref[...].reshape(2, Sk, H)            # [key, value]
    q2d = q_ref[...].reshape(Sq, H)               # residual

    bf = vecs_ref[0:1, :]                         # (1, H)
    gamma = vecs_ref[1:2, :]
    beta = vecs_ref[2:3, :]

    # ---- fused K/V projection: one batched MXU matmul over (kv, head) -----
    kvb = jnp.broadcast_to(kv.reshape(2, 1, Sk, H),
                           (2, h, Sk, H)).reshape(2 * h, Sk, H)
    KV = jax.lax.dot_general(kvb, wkv_ref[...],
                             dimension_numbers=(((2,), (1,)), ((0,), (0,))),
                             preferred_element_type=jnp.float32)   # (2h, Sk, dh)
    K = KV[:h]                                    # (h, Sk, dh)
    V = KV[h:]                                    # (h, Sk, dh)

    # ---- Q projection (scale already folded into the weight) --------------
    qb = jnp.broadcast_to(q2d.reshape(1, Sq, H), (h, Sq, H))
    Q = jax.lax.dot_general(qb, wq_ref[...],
                            dimension_numbers=(((2,), (1,)), ((0,), (0,))),
                            preferred_element_type=jnp.float32)    # (h, Sq, dh)

    # ---- scaled dot-product attention, heads batched -----------------------
    s = jax.lax.dot_general(Q, K,
                            dimension_numbers=(((2,), (2,)), ((0,), (0,))),
                            preferred_element_type=jnp.float32)    # (h, Sq, Sk)
    s = s - jnp.max(s, axis=-1, keepdims=True)
    e = jnp.exp(s)
    denom = jnp.sum(e, axis=-1, keepdims=True)
    inv = pl.reciprocal(denom, approx=True)       # EUP seed ...
    inv = inv * (2.0 - denom * inv)               # ... + 1 Newton step -> full f32
    attn = e * inv
    # NOTE: Sk < 128 makes these stores masked (vst.msk); unavoidable given the
    # module's required (h*B, Sq, Sk) attention-map output.
    attn_ref[...] = attn.reshape(h, 1, Sq, Sk)

    ctx = jax.lax.dot_general(attn, V,
                              dimension_numbers=(((2,), (1,)), ((0,), (0,))),
                              preferred_element_type=jnp.float32)  # (h, Sq, dh)

    # ---- final linear: cat([residual, ctx]) @ Wf.T + bf, Wf pre-split ------
    # (per-head ctx contributions are accumulated directly through the split
    #  weight -- no lane-axis concatenation anywhere)
    attn_part = jax.lax.dot_general(ctx, wfa_ref[...],
                                    dimension_numbers=(((2,), (1,)), ((0,), (0,))),
                                    preferred_element_type=jnp.float32)  # (h, Sq, H)
    final = (jnp.dot(q2d, wfr_ref[...], preferred_element_type=jnp.float32)
             + jnp.sum(attn_part, axis=0)
             + bf)

    x = final + q2d                               # residual add

    # LayerNorm over the last dim (eps=1e-5, affine)
    mean = jnp.mean(x, axis=-1, keepdims=True)
    var = jnp.mean((x - mean) ** 2, axis=-1, keepdims=True)
    xn = (x - mean) * jax.lax.rsqrt(var + eps)
    out_ref[...] = (xn * gamma + beta).reshape(1, Sq, H)


def attention_forward(key, value, query, params, *, h):
    B, Sk, H = key.shape
    Sq = query.shape[1]
    dh = H // h
    wk, wv, wq, wf, bf, gamma, beta = params

    # ---- host-side weight preparation (free, once per call) ----------------
    def split_heads(w):          # (H, H) nn.Linear weight -> (h, H, dh), x @ w form
        return jnp.transpose(w.reshape(h, dh, H), (0, 2, 1))

    wkv_h = jnp.concatenate([split_heads(wk), split_heads(wv)], axis=0)   # (2h, H, dh)
    wq_h = split_heads(wq * (1.0 / math.sqrt(dh)))                        # (h, H, dh)
    wf_res_t = wf[:, :H].T                                                # (H, H)
    wf_attn_h = wf[:, H:].T.reshape(h, dh, H)                             # (h, dh, H)
    kv = jnp.stack([key, value], axis=0)                                  # (2, B, Sk, H)
    vecs = jnp.stack([bf, gamma, beta], axis=0)                           # (3, H)

    kernel = functools.partial(_attention_kernel, h=h, eps=1e-5)

    out, attn4 = pl.pallas_call(
        kernel,
        out_shape=(
            jax.ShapeDtypeStruct((B, Sq, H), jnp.float32),
            jax.ShapeDtypeStruct((h, B, Sq, Sk), jnp.float32),
        ),
        grid_spec=pltpu.PrefetchScalarGridSpec(
            num_scalar_prefetch=0,
            grid=(B,),
            in_specs=[
                pl.BlockSpec((2, 1, Sk, H), lambda b: (0, b, 0, 0)),     # [key, value]
                pl.BlockSpec((1, Sq, H), lambda b: (b, 0, 0)),           # query / residual
                pl.BlockSpec((2 * h, H, dh), lambda b: (0, 0, 0)),       # Wk/Wv per head
                pl.BlockSpec((h, H, dh), lambda b: (0, 0, 0)),           # Wq per head (scaled)
                pl.BlockSpec((H, H), lambda b: (0, 0)),                  # Wf residual half
                pl.BlockSpec((h, dh, H), lambda b: (0, 0, 0)),           # Wf attn half per head
                pl.BlockSpec((3, H), lambda b: (0, 0)),                  # [bf, gamma, beta]
            ],
            out_specs=[
                pl.BlockSpec((1, Sq, H), lambda b: (b, 0, 0)),
                pl.BlockSpec((h, 1, Sq, Sk), lambda b: (0, b, 0, 0)),
            ],
        ),
        compiler_params=pltpu.CompilerParams(dimension_semantics=("parallel",)),
    )(kv, query, wkv_h, wq_h, wf_res_t, wf_attn_h, vecs)

    attns = attn4.reshape(h * B, Sq, Sk)   # head-major, matches torch permute/reshape
    return out, attns


def _reference(key, value, query, params, *, h):
    """Pure-JAX reference mirroring the PyTorch forward (eval mode)."""
    wk, wv, wq, wf, bf, gamma, beta = params
    B, Sk, H = key.shape
    Sq = query.shape[1]
    dh = H // h
    residual = query
    K = key @ wk.T
    V = value @ wv.T
    Q = query @ wq.T
    K = K.reshape(B, Sk, h, dh).transpose(2, 0, 1, 3).reshape(h * B, Sk, dh)
    V = V.reshape(B, Sk, h, dh).transpose(2, 0, 1, 3).reshape(h * B, Sk, dh)
    Q = Q.reshape(B, Sq, h, dh).transpose(2, 0, 1, 3).reshape(h * B, Sq, dh)
    attn = jnp.einsum("bqd,bkd->bqk", Q, K) / math.sqrt(dh)
    attn = jax.nn.softmax(attn, axis=-1)
    res = jnp.einsum("bqk,bkd->bqd", attn, V)
    res = res.reshape(h, B, Sq, dh).transpose(1, 2, 0, 3).reshape(B, Sq, H)
    res = jnp.concatenate([residual, res], axis=-1) @ wf.T + bf
    res = res + residual
    mean = jnp.mean(res, axis=-1, keepdims=True)
    var = jnp.mean((res - mean) ** 2, axis=-1, keepdims=True)
    res = (res - mean) / jnp.sqrt(var + 1e-5) * gamma + beta
    return res, attn


def _xavier_uniform(key, shape):
    fan_out, fan_in = shape
    bound = math.sqrt(6.0 / (fan_in + fan_out))
    return jax.random.uniform(key, shape, jnp.float32, -bound, bound)


if __name__ == "__main__":
    B, S, H, NUM_HEADS = 2, 8, 32, 2

    root = jax.random.PRNGKey(0)
    ks = jax.random.split(root, 8)

    # Deterministic parameter init (synthetic; matches shapes of the PyTorch module).
    wk = _xavier_uniform(ks[0], (H, H))
    wv = _xavier_uniform(ks[1], (H, H))
    wq = _xavier_uniform(ks[2], (H, H))
    wf = _xavier_uniform(ks[3], (H, 2 * H))
    bf = jax.random.uniform(ks[4], (H,), jnp.float32,
                            -1.0 / math.sqrt(2 * H), 1.0 / math.sqrt(2 * H))
    gamma = jnp.ones((H,), jnp.float32)
    beta = jnp.zeros((H,), jnp.float32)
    params = (wk, wv, wq, wf, bf, gamma, beta)

    key_in = jax.random.normal(ks[5], (B, S, H), jnp.float32)
    value_in = jax.random.normal(ks[6], (B, S, H), jnp.float32)
    query_in = jax.random.normal(ks[7], (B, S, H), jnp.float32)

    out, attns = attention_forward(key_in, value_in, query_in, params, h=NUM_HEADS)
    out = jax.block_until_ready(out)
    attns = jax.block_until_ready(attns)

    ref_out, ref_attn = _reference(key_in, value_in, query_in, params, h=NUM_HEADS)
    np.testing.assert_allclose(np.asarray(out), np.asarray(ref_out), rtol=1e-4, atol=1e-4)
    np.testing.assert_allclose(np.asarray(attns), np.asarray(ref_attn), rtol=1e-4, atol=1e-4)

    print("KERNEL_OK")
</pallas_src>

<mosaic_0001>
module attributes {stable_mosaic.version = 11 : i64} {
  func.func @_attention_kernel(%arg0: i32, %arg1: memref<2x1x8x32xf32, #tpu.memory_space<vmem>>, %arg2: memref<1x8x32xf32, #tpu.memory_space<vmem>>, %arg3: memref<4x32x16xf32, #tpu.memory_space<vmem>>, %arg4: memref<2x32x16xf32, #tpu.memory_space<vmem>>, %arg5: memref<32x32xf32, #tpu.memory_space<vmem>>, %arg6: memref<2x16x32xf32, #tpu.memory_space<vmem>>, %arg7: memref<3x32xf32, #tpu.memory_space<vmem>>, %arg8: memref<1x8x32xf32, #tpu.memory_space<vmem>>, %arg9: memref<2x1x8x8xf32, #tpu.memory_space<vmem>>) attributes {dimension_semantics = [#tpu.dimension_semantics<parallel>], iteration_bounds = array<i64: 2>, scalar_prefetch = 0 : i64, scratch_operands = 0 : i64, tpu.core_type = #tpu.core_type<tc>, window_params = [{transform_indices = @transform_0, window_bounds = array<i64: 2, 1, 8, 32>}, {transform_indices = @transform_1, window_bounds = array<i64: 1, 8, 32>}, {pipeline_mode = #tpu.pipeline_mode<synchronous>, transform_indices = @transform_2, window_bounds = array<i64: 4, 32, 16>}, {pipeline_mode = #tpu.pipeline_mode<synchronous>, transform_indices = @transform_3, window_bounds = array<i64: 2, 32, 16>}, {pipeline_mode = #tpu.pipeline_mode<synchronous>, transform_indices = @transform_4, window_bounds = array<i64: 32, 32>}, {pipeline_mode = #tpu.pipeline_mode<synchronous>, transform_indices = @transform_5, window_bounds = array<i64: 2, 16, 32>}, {pipeline_mode = #tpu.pipeline_mode<synchronous>, transform_indices = @transform_6, window_bounds = array<i64: 3, 32>}, {transform_indices = @transform_7, window_bounds = array<i64: 1, 8, 32>}, {transform_indices = @transform_8, window_bounds = array<i64: 2, 1, 8, 8>}]} {
    %c0 = arith.constant 0 : index
    %c0_0 = arith.constant 0 : index
    %c0_1 = arith.constant 0 : index
    %c0_2 = arith.constant 0 : index
    %0 = vector.load %arg1[%c0, %c0_0, %c0_1, %c0_2] : memref<2x1x8x32xf32, #tpu.memory_space<vmem>>, vector<2x1x8x32xf32>
    %1 = vector.shape_cast %0 : vector<2x1x8x32xf32> to vector<2x8x32xf32>
    %c0_3 = arith.constant 0 : index
    %c0_4 = arith.constant 0 : index
    %c0_5 = arith.constant 0 : index
    %2 = vector.load %arg2[%c0_3, %c0_4, %c0_5] : memref<1x8x32xf32, #tpu.memory_space<vmem>>, vector<1x8x32xf32>
    %3 = vector.shape_cast %2 : vector<1x8x32xf32> to vector<8x32xf32>
    %c0_6 = arith.constant 0 : index
    %c0_7 = arith.constant 0 : index
    %4 = vector.load %arg7[%c0_6, %c0_7] : memref<3x32xf32, #tpu.memory_space<vmem>>, vector<1x32xf32>
    %c1 = arith.constant 1 : index
    %c0_8 = arith.constant 0 : index
    %5 = vector.load %arg7[%c1, %c0_8] : memref<3x32xf32, #tpu.memory_space<vmem>>, vector<1x32xf32>
    %c2 = arith.constant 2 : index
    %c0_9 = arith.constant 0 : index
    %6 = vector.load %arg7[%c2, %c0_9] : memref<3x32xf32, #tpu.memory_space<vmem>>, vector<1x32xf32>
    %7 = vector.shape_cast %1 : vector<2x8x32xf32> to vector<2x1x8x32xf32>
    %8 = vector.shape_cast %7 : vector<2x1x8x32xf32> to vector<2x1x8x32xf32>
    %9 = vector.broadcast %8 : vector<2x1x8x32xf32> to vector<2x2x8x32xf32>
    %10 = vector.shape_cast %9 : vector<2x2x8x32xf32> to vector<4x8x32xf32>
    %c0_10 = arith.constant 0 : index
    %c0_11 = arith.constant 0 : index
    %c0_12 = arith.constant 0 : index
    %11 = vector.load %arg3[%c0_10, %c0_11, %c0_12] : memref<4x32x16xf32, #tpu.memory_space<vmem>>, vector<4x32x16xf32>
    %cst = arith.constant dense<0.000000e+00> : vector<4x8x16xf32>
    %12 = tpu.matmul %10, %11, %cst {dimension_numbers = #tpu.dot_dimension_numbers<[2], [1], [1], [2], [0, 0, 0, 1, 1, 2], [0], [0]>} : vector<4x8x32xf32>, vector<4x32x16xf32>, vector<4x8x16xf32> -> vector<4x8x16xf32>
    %13 = vector.extract_strided_slice %12 {offsets = [0, 0, 0], sizes = [2, 8, 16], strides = [1, 1, 1]} : vector<4x8x16xf32> to vector<2x8x16xf32>
    %14 = vector.extract_strided_slice %12 {offsets = [2, 0, 0], sizes = [2, 8, 16], strides = [1, 1, 1]} : vector<4x8x16xf32> to vector<2x8x16xf32>
    %15 = vector.shape_cast %3 : vector<8x32xf32> to vector<1x8x32xf32>
    %16 = vector.shape_cast %15 : vector<1x8x32xf32> to vector<1x8x32xf32>
    %17 = vector.broadcast %16 : vector<1x8x32xf32> to vector<2x8x32xf32>
    %c0_13 = arith.constant 0 : index
    %c0_14 = arith.constant 0 : index
    %c0_15 = arith.constant 0 : index
    %18 = vector.load %arg4[%c0_13, %c0_14, %c0_15] : memref<2x32x16xf32, #tpu.memory_space<vmem>>, vector<2x32x16xf32>
    %cst_16 = arith.constant dense<0.000000e+00> : vector<2x8x16xf32>
    %19 = tpu.matmul %17, %18, %cst_16 {dimension_numbers = #tpu.dot_dimension_numbers<[2], [1], [1], [2], [0, 0, 0, 1, 1, 2], [0], [0]>} : vector<2x8x32xf32>, vector<2x32x16xf32>, vector<2x8x16xf32> -> vector<2x8x16xf32>
    %cst_17 = arith.constant dense<0.000000e+00> : vector<2x8x8xf32>
    %20 = tpu.matmul %19, %13, %cst_17 {dimension_numbers = #tpu.dot_dimension_numbers<[2], [2], [1], [1], [0, 0, 0, 1, 1, 1], [0], [0]>} : vector<2x8x16xf32>, vector<2x8x16xf32>, vector<2x8x8xf32> -> vector<2x8x8xf32>
    %cst_18 = arith.constant dense<0xFF800000> : vector<2x8xf32>
    %21 = vector.multi_reduction <maximumf>, %20, %cst_18 [2] : vector<2x8x8xf32> to vector<2x8xf32>
    %22 = vector.shape_cast %21 : vector<2x8xf32> to vector<2x8x1xf32>
    %23 = vector.broadcast %22 : vector<2x8x1xf32> to vector<2x8x8xf32>
    %24 = arith.subf %20, %23 : vector<2x8x8xf32>
    %25 = math.exp %24 : vector<2x8x8xf32>
    %cst_19 = arith.constant dense<0.000000e+00> : vector<2x8xf32>
    %26 = vector.multi_reduction <add>, %25, %cst_19 [2] : vector<2x8x8xf32> to vector<2x8xf32>
    %27 = vector.shape_cast %26 : vector<2x8xf32> to vector<2x8x1xf32>
    %28 = tpu.reciprocal %27 {approx = true} : vector<2x8x1xf32> -> vector<2x8x1xf32>
    %29 = arith.mulf %27, %28 : vector<2x8x1xf32>
    %cst_20 = arith.constant 2.000000e+00 : f32
    %30 = vector.broadcast %cst_20 : f32 to vector<2x8x1xf32>
    %31 = arith.subf %30, %29 : vector<2x8x1xf32>
    %32 = arith.mulf %28, %31 : vector<2x8x1xf32>
    %33 = vector.broadcast %32 : vector<2x8x1xf32> to vector<2x8x8xf32>
    %34 = arith.mulf %25, %33 : vector<2x8x8xf32>
    %35 = vector.shape_cast %34 : vector<2x8x8xf32> to vector<2x1x8x8xf32>
    %c0_21 = arith.constant 0 : index
    %c0_22 = arith.constant 0 : index
    %c0_23 = arith.constant 0 : index
    %c0_24 = arith.constant 0 : index
    %36 = vector.load %arg9[%c0_21, %c0_22, %c0_23, %c0_24] : memref<2x1x8x8xf32, #tpu.memory_space<vmem>>, vector<2x1x8x8xf32>
    tpu.vector_store %arg9[%c0_21, %c0_22, %c0_23, %c0_24], %35 {strides = array<i32>} : memref<2x1x8x8xf32, #tpu.memory_space<vmem>>, vector<2x1x8x8xf32>,
    %cst_25 = arith.constant dense<0.000000e+00> : vector<2x8x16xf32>
    %37 = tpu.matmul %34, %14, %cst_25 {dimension_numbers = #tpu.dot_dimension_numbers<[2], [1], [1], [2], [0, 0, 0, 1, 1, 2], [0], [0]>} : vector<2x8x8xf32>, vector<2x8x16xf32>, vector<2x8x16xf32> -> vector<2x8x16xf32>
    %c0_26 = arith.constant 0 : index
    %c0_27 = arith.constant 0 : index
    %c0_28 = arith.constant 0 : index
    %38 = vector.load %arg6[%c0_26, %c0_27, %c0_28] : memref<2x16x32xf32, #tpu.memory_space<vmem>>, vector<2x16x32xf32>
    %cst_29 = arith.constant dense<0.000000e+00> : vector<2x8x32xf32>
    %39 = tpu.matmul %37, %38, %cst_29 {dimension_numbers = #tpu.dot_dimension_numbers<[2], [1], [1], [2], [0, 0, 0, 1, 1, 2], [0], [0]>} : vector<2x8x16xf32>, vector<2x16x32xf32>, vector<2x8x32xf32> -> vector<2x8x32xf32>
    %c0_30 = arith.constant 0 : index
    %c0_31 = arith.constant 0 : index
    %40 = vector.load %arg5[%c0_30, %c0_31] : memref<32x32xf32, #tpu.memory_space<vmem>>, vector<32x32xf32>
    %cst_32 = arith.constant dense<0.000000e+00> : vector<8x32xf32>
    %41 = tpu.matmul %3, %40, %cst_32 {dimension_numbers = #tpu.dot_dimension_numbers<[1], [0], [0], [1], [0, 0, 1, 1], [], []>} : vector<8x32xf32>, vector<32x32xf32>, vector<8x32xf32> -> vector<8x32xf32>
    %cst_33 = arith.constant dense<0.000000e+00> : vector<8x32xf32>
    %42 = vector.multi_reduction <add>, %39, %cst_33 [0] : vector<2x8x32xf32> to vector<8x32xf32>
    %43 = arith.addf %41, %42 : vector<8x32xf32>
    %44 = vector.broadcast %4 : vector<1x32xf32> to vector<8x32xf32>
    %45 = arith.addf %43, %44 : vector<8x32xf32>
    %46 = arith.addf %45, %3 : vector<8x32xf32>
    %cst_34 = arith.constant dense<0.000000e+00> : vector<8xf32>
    %47 = vector.multi_reduction <add>, %46, %cst_34 [1] : vector<8x32xf32> to vector<8xf32>
    %48 = vector.shape_cast %47 : vector<8xf32> to vector<8x1xf32>
    %cst_35 = arith.constant 3.200000e+01 : f32
    %49 = vector.broadcast %cst_35 : f32 to vector<8x1xf32>
    %50 = arith.divf %48, %49 : vector<8x1xf32>
    %51 = vector.broadcast %50 : vector<8x1xf32> to vector<8x32xf32>
    %52 = arith.subf %46, %51 : vector<8x32xf32>
    %53 = arith.mulf %52, %52 : vector<8x32xf32>
    %cst_36 = arith.constant dense<0.000000e+00> : vector<8xf32>
    %54 = vector.multi_reduction <add>, %53, %cst_36 [1] : vector<8x32xf32> to vector<8xf32>
    %55 = vector.shape_cast %54 : vector<8xf32> to vector<8x1xf32>
    %cst_37 = arith.constant 3.200000e+01 : f32
    %56 = vector.broadcast %cst_37 : f32 to vector<8x1xf32>
    %57 = arith.divf %55, %56 : vector<8x1xf32>
    %58 = vector.broadcast %50 : vector<8x1xf32> to vector<8x32xf32>
    %59 = arith.subf %46, %58 : vector<8x32xf32>
    %cst_38 = arith.constant 9.99999974E-6 : f32
    %60 = vector.broadcast %cst_38 : f32 to vector<8x1xf32>
    %61 = arith.addf %57, %60 : vector<8x1xf32>
    %62 = math.rsqrt %61 : vector<8x1xf32>
    %63 = vector.broadcast %62 : vector<8x1xf32> to vector<8x32xf32>
    %64 = arith.mulf %59, %63 : vector<8x32xf32>
    %65 = vector.broadcast %5 : vector<1x32xf32> to vector<8x32xf32>
    %66 = arith.mulf %64, %65 : vector<8x32xf32>
    %67 = vector.broadcast %6 : vector<1x32xf32> to vector<8x32xf32>
    %68 = arith.addf %66, %67 : vector<8x32xf32>
    %69 = vector.shape_cast %68 : vector<8x32xf32> to vector<1x8x32xf32>
    %c0_39 = arith.constant 0 : index
    %c0_40 = arith.constant 0 : index
    %c0_41 = arith.constant 0 : index
    %70 = vector.load %arg8[%c0_39, %c0_40, %c0_41] : memref<1x8x32xf32, #tpu.memory_space<vmem>>, vector<1x8x32xf32>
    tpu.vector_store %arg8[%c0_39, %c0_40, %c0_41], %69 {strides = array<i32>} : memref<1x8x32xf32, #tpu.memory_space<vmem>>, vector<1x8x32xf32>,
    return
  }
  func.func @transform_0(%arg0: i32) -> (i32, i32, i32, i32) {
    %c0_i32 = arith.constant 0 : i32
    %c0_i32_0 = arith.constant 0 : i32
    %c0_i32_1 = arith.constant 0 : i32
    %c0_i32_2 = arith.constant 0 : i32
    return %c0_i32, %arg0, %c0_i32_0, %c0_i32_1 : i32, i32, i32, i32
  }
  func.func @transform_1(%arg0: i32) -> (i32, i32, i32) {
    %c0_i32 = arith.constant 0 : i32
    %c0_i32_0 = arith.constant 0 : i32
    %c0_i32_1 = arith.constant 0 : i32
    return %arg0, %c0_i32, %c0_i32_0 : i32, i32, i32
  }
  func.func @transform_2(%arg0: i32) -> (i32, i32, i32) {
    %c0_i32 = arith.constant 0 : i32
    %c0_i32_0 = arith.constant 0 : i32
    %c0_i32_1 = arith.constant 0 : i32
    %c0_i32_2 = arith.constant 0 : i32
    return %c0_i32, %c0_i32_0, %c0_i32_1 : i32, i32, i32
  }
  func.func @transform_3(%arg0: i32) -> (i32, i32, i32) {
    %c0_i32 = arith.constant 0 : i32
    %c0_i32_0 = arith.constant 0 : i32
    %c0_i32_1 = arith.constant 0 : i32
    %c0_i32_2 = arith.constant 0 : i32
    return %c0_i32, %c0_i32_0, %c0_i32_1 : i32, i32, i32
  }
  func.func @transform_4(%arg0: i32) -> (i32, i32) {
    %c0_i32 = arith.constant 0 : i32
    %c0_i32_0 = arith.constant 0 : i32
    %c0_i32_1 = arith.constant 0 : i32
    return %c0_i32, %c0_i32_0 : i32, i32
  }
  func.func @transform_5(%arg0: i32) -> (i32, i32, i32) {
    %c0_i32 = arith.constant 0 : i32
    %c0_i32_0 = arith.constant 0 : i32
    %c0_i32_1 = arith.constant 0 : i32
    %c0_i32_2 = arith.constant 0 : i32
    return %c0_i32, %c0_i32_0, %c0_i32_1 : i32, i32, i32
  }
  func.func @transform_6(%arg0: i32) -> (i32, i32) {
    %c0_i32 = arith.constant 0 : i32
    %c0_i32_0 = arith.constant 0 : i32
    %c0_i32_1 = arith.constant 0 : i32
    return %c0_i32, %c0_i32_0 : i32, i32
  }
  func.func @transform_7(%arg0: i32) -> (i32, i32, i32) {
    %c0_i32 = arith.constant 0 : i32
    %c0_i32_0 = arith.constant 0 : i32
    %c0_i32_1 = arith.constant 0 : i32
    return %arg0, %c0_i32, %c0_i32_0 : i32, i32, i32
  }
  func.func @transform_8(%arg0: i32) -> (i32, i32, i32, i32) {
    %c0_i32 = arith.constant 0 : i32
    %c0_i32_0 = arith.constant 0 : i32
    %c0_i32_1 = arith.constant 0 : i32
    %c0_i32_2 = arith.constant 0 : i32
    return %c0_i32, %arg0, %c0_i32_0, %c0_i32_1 : i32, i32, i32, i32
  }
}

</mosaic_0001>

<llo_original>
// kernel: tpu_custom_call.1
$region0: #{tpu_custom_call.1}
  #allocation0 [shape = 'u32[]', space=smem, size = 0x4, offset = 0x4, fixed_abs, tag = 'smem constant byte address 0x4 - core index']
  #allocation1 [shape = 'u32[144,128]{1,0:T(1,128)}', space=vmem, size = 0x12000, scoped, tag = 'internal scratch']
  %s0 = inlined_call_operand.vmem [shape: f32[2,2,8,32], index: 0, kind: input, shape index: {}]
  %s1 = inlined_call_operand.vmem [shape: f32[2,8,32], index: 1, kind: input, shape index: {}]
  %s2 = inlined_call_operand.vmem [shape: f32[4,32,16], index: 2, kind: input, shape index: {}]
  %s3 = inlined_call_operand.vmem [shape: f32[2,32,16], index: 3, kind: input, shape index: {}]
  %s4 = inlined_call_operand.vmem [shape: f32[32,32], index: 4, kind: input, shape index: {}]
  %s5 = inlined_call_operand.vmem [shape: f32[2,16,32], index: 5, kind: input, shape index: {}]
  %s6 = inlined_call_operand.vmem [shape: f32[3,32], index: 6, kind: input, shape index: {}]
  %s7 = inlined_call_operand.hbm [shape: f32[2,8,32], index: 7, kind: output, shape index: {0}]
  %s8 = inlined_call_operand.hbm [shape: f32[2,2,8,8], index: 8, kind: output, shape index: {1}]
  %9 = xla_tuple %s7, %s8
  %s10 = sld [smem:[#allocation0]]
  $region107: #{tpu_custom_call.1} parent=0
    _
  %s12 = ssub.s32 1, %s10
  %s13 = scalar_select 0, %s12, %s10
  $region1: #{tpu_custom_call.1} parent=0
    #allocation2 [shape = 'u8[16384]{0}', space=vmem, size = 0x4000, scoped, tag = 'input window, operand 0']
    #allocation3 [shape = 'u8[8192]{0}', space=vmem, size = 0x2000, scoped, tag = 'output window, operand 0']
    #allocation4 [shape = 's32[2]{0}', space=sflag, size = 0x8, scoped, tag = 'scoped memory for tpu_custom_call.1']
    #allocation5 [shape = 'u8[16384]{0}', space=vmem, size = 0x4000, scoped, tag = 'output window, operand 1']
    #allocation6 [shape = 's32[2]{0}', space=sflag, size = 0x8, scoped, tag = 'scoped memory for tpu_custom_call.1']
    %14 = vsyncpa [#allocation4], 0
    %s15 = scalar_lea.sflag [#allocation4], 1
    %16 = vsyncpa %s15, 0
    %17 = vsyncpa [#allocation6], 0
    %s18 = scalar_lea.sflag [#allocation6], 1
    %19 = vsyncpa %s18, 0
    loop: start=0, step=1, limit=4
    $region2: #{tpu_custom_call.1} parent=1 // loop_pre_header
      _
    $region3: #{tpu_custom_call.1} parent=1 // loop_header
      %s21 = sphi 0, %s25
      %p22 = scmp.ge.s32.totalorder %s21, 4
      %s31 = sphi 0, %s33
      %s34 = sphi 0, %s31
      %s35 = sphi 0, %s34
      %s51 = sphi 0, %s35
      %s57 = sphi 0, %s59
      %s60 = sphi 0, %s57
      %s61 = sphi 0, %s60
      %s77 = sphi 0, %s61
      %s81 = sphi 0, %s81
      %s83 = sphi 0, %s81
      %s84 = sphi 0, %s83
      %s98 = sphi 0, %s84
      %s102 = sphi 0, %s102
      %s104 = sphi 0, %s102
      %s105 = sphi 0, %s104
      %s119 = sphi 0, %s105
      %s123 = sphi 0, %s123
      %s125 = sphi 0, %s123
      %s126 = sphi 0, %s125
      %s140 = sphi 0, %s126
      %s144 = sphi 0, %s144
      %s146 = sphi 0, %s144
      %s147 = sphi 0, %s146
      %s161 = sphi 0, %s147
      %s165 = sphi 0, %s165
      %s167 = sphi 0, %s165
      %s168 = sphi 0, %s167
      %s182 = sphi 0, %s168
      %s188 = sphi 0, %s190
      %s191 = sphi 0, %s188
      %s192 = sphi 0, %s191
      %s208 = sphi 0, %s192
      %s214 = sphi 0, %s216
      %s217 = sphi 0, %s214
      %s218 = sphi 0, %s217
      %s234 = sphi 0, %s218
    $region4: #{tpu_custom_call.1} parent=1 // loop_header_branch
      %24 = sbr.rel (%p22) target = $region8
    $region5: #{tpu_custom_call.1} parent=1 // loop_body
      %s26 = ssub.s32 %s21, 1
      %s27 = ssub.s32 %s21, 2
      %s28 = sadd.s32 %s21, 1
      %s29 = ssub.s32 %s21, %s28
      %p30 = scmp.eq.s32.totalorder %s29, 0
      %s32 = sadd.s32 %s31, 1
      %s33 = scalar_select %p30, %s31, %s32
      %p36 = pneg %p30
      %p37 = scmp.eq.s32.totalorder %s21, 1
      %p38 = por %p36, %p37
      %p39 = scmp.ne.s32.totalorder %s31, %s34
      %p40 = scmp.eq.s32.totalorder %s21, 0
      %p41 = por %p39, %p40
      %p42 = scmp.ne.s32.totalorder %s31, %s34
      %p43 = scmp.eq.s32.totalorder %s26, 1
      %p44 = por %p42, %p43
      %p45 = scmp.ne.s32.totalorder %s34, %s35
      %p46 = scmp.eq.s32.totalorder %s26, 0
      %p47 = por %p45, %p46
      %p48 = scmp.ne.s32.totalorder %s34, %s35
      %p49 = scmp.eq.s32.totalorder %s27, 1
      %p50 = por %p48, %p49
      %p52 = scmp.ne.s32.totalorder %s35, %s51
      %p53 = scmp.eq.s32.totalorder %s27, 0
      %p54 = por %p52, %p53
      %s55 = ssub.s32 %s21, %s28
      %p56 = scmp.eq.s32.totalorder %s55, 0
      %s58 = sadd.s32 %s57, 1
      %s59 = scalar_select %p56, %s57, %s58
      %p62 = pneg %p56
      %p63 = scmp.eq.s32.totalorder %s21, 1
      %p64 = por %p62, %p63
      %p65 = scmp.ne.s32.totalorder %s57, %s60
      %p66 = scmp.eq.s32.totalorder %s21, 0
      %p67 = por %p65, %p66
      %p68 = scmp.ne.s32.totalorder %s57, %s60
      %p69 = scmp.eq.s32.totalorder %s26, 1
      %p70 = por %p68, %p69
      %p71 = scmp.ne.s32.totalorder %s60, %s61
      %p72 = scmp.eq.s32.totalorder %s26, 0
      %p73 = por %p71, %p72
      %p74 = scmp.ne.s32.totalorder %s60, %s61
      %p75 = scmp.eq.s32.totalorder %s27, 1
      %p76 = por %p74, %p75
      %p78 = scmp.ne.s32.totalorder %s61, %s77
      %p79 = scmp.eq.s32.totalorder %s27, 0
      %p80 = por %p78, %p79
      %s82 = sadd.s32 %s81, 1
      %p85 = scmp.eq.s32.totalorder %s21, 1
      %p86 = scmp.ne.s32.totalorder %s81, %s83
      %p87 = scmp.eq.s32.totalorder %s21, 0
      %p88 = por %p86, %p87
      %p89 = scmp.ne.s32.totalorder %s81, %s83
      %p90 = scmp.eq.s32.totalorder %s26, 1
      %p91 = por %p89, %p90
      %p92 = scmp.ne.s32.totalorder %s83, %s84
      %p93 = scmp.eq.s32.totalorder %s26, 0
      %p94 = por %p92, %p93
      %p95 = scmp.ne.s32.totalorder %s83, %s84
      %p96 = scmp.eq.s32.totalorder %s27, 1
      %p97 = por %p95, %p96
      %p99 = scmp.ne.s32.totalorder %s84, %s98
      %p100 = scmp.eq.s32.totalorder %s27, 0
      %p101 = por %p99, %p100
      %s103 = sadd.s32 %s102, 1
      %p106 = scmp.eq.s32.totalorder %s21, 1
      %p107 = scmp.ne.s32.totalorder %s102, %s104
      %p108 = scmp.eq.s32.totalorder %s21, 0
      %p109 = por %p107, %p108
      %p110 = scmp.ne.s32.totalorder %s102, %s104
      %p111 = scmp.eq.s32.totalorder %s26, 1
      %p112 = por %p110, %p111
      %p113 = scmp.ne.s32.totalorder %s104, %s105
      %p114 = scmp.eq.s32.totalorder %s26, 0
      %p115 = por %p113, %p114
      %p116 = scmp.ne.s32.totalorder %s104, %s105
      %p117 = scmp.eq.s32.totalorder %s27, 1
      %p118 = por %p116, %p117
      %p120 = scmp.ne.s32.totalorder %s105, %s119
      %p121 = scmp.eq.s32.totalorder %s27, 0
      %p122 = por %p120, %p121
      %s124 = sadd.s32 %s123, 1
      %p127 = scmp.eq.s32.totalorder %s21, 1
      %p128 = scmp.ne.s32.totalorder %s123, %s125
      %p129 = scmp.eq.s32.totalorder %s21, 0
      %p130 = por %p128, %p129
      %p131 = scmp.ne.s32.totalorder %s123, %s125
      %p132 = scmp.eq.s32.totalorder %s26, 1
      %p133 = por %p131, %p132
      %p134 = scmp.ne.s32.totalorder %s125, %s126
      %p135 = scmp.eq.s32.totalorder %s26, 0
      %p136 = por %p134, %p135
      %p137 = scmp.ne.s32.totalorder %s125, %s126
      %p138 = scmp.eq.s32.totalorder %s27, 1
      %p139 = por %p137, %p138
      %p141 = scmp.ne.s32.totalorder %s126, %s140
      %p142 = scmp.eq.s32.totalorder %s27, 0
      %p143 = por %p141, %p142
      %s145 = sadd.s32 %s144, 1
      %p148 = scmp.eq.s32.totalorder %s21, 1
      %p149 = scmp.ne.s32.totalorder %s144, %s146
      %p150 = scmp.eq.s32.totalorder %s21, 0
      %p151 = por %p149, %p150
      %p152 = scmp.ne.s32.totalorder %s144, %s146
      %p153 = scmp.eq.s32.totalorder %s26, 1
      %p154 = por %p152, %p153
      %p155 = scmp.ne.s32.totalorder %s146, %s147
      %p156 = scmp.eq.s32.totalorder %s26, 0
      %p157 = por %p155, %p156
      %p158 = scmp.ne.s32.totalorder %s146, %s147
      %p159 = scmp.eq.s32.totalorder %s27, 1
      %p160 = por %p158, %p159
      %p162 = scmp.ne.s32.totalorder %s147, %s161
      %p163 = scmp.eq.s32.totalorder %s27, 0
      %p164 = por %p162, %p163
      %s166 = sadd.s32 %s165, 1
      %p169 = scmp.eq.s32.totalorder %s21, 1
      %p170 = scmp.ne.s32.totalorder %s165, %s167
      %p171 = scmp.eq.s32.totalorder %s21, 0
      %p172 = por %p170, %p171
      %p173 = scmp.ne.s32.totalorder %s165, %s167
      %p174 = scmp.eq.s32.totalorder %s26, 1
      %p175 = por %p173, %p174
      %p176 = scmp.ne.s32.totalorder %s167, %s168
      %p177 = scmp.eq.s32.totalorder %s26, 0
      %p178 = por %p176, %p177
      %p179 = scmp.ne.s32.totalorder %s167, %s168
      %p180 = scmp.eq.s32.totalorder %s27, 1
      %p181 = por %p179, %p180
      %p183 = scmp.ne.s32.totalorder %s168, %s182
      %p184 = scmp.eq.s32.totalorder %s27, 0
      %p185 = por %p183, %p184
      %s186 = ssub.s32 %s21, %s28
      %p187 = scmp.eq.s32.totalorder %s186, 0
      %s189 = sadd.s32 %s188, 1
      %s190 = scalar_select %p187, %s188, %s189
      %p193 = pneg %p187
      %p194 = scmp.eq.s32.totalorder %s21, 1
      %p195 = por %p193, %p194
      %p196 = scmp.ne.s32.totalorder %s188, %s191
      %p197 = scmp.eq.s32.totalorder %s21, 0
      %p198 = por %p196, %p197
      %p199 = scmp.ne.s32.totalorder %s188, %s191
      %p200 = scmp.eq.s32.totalorder %s26, 1
      %p201 = por %p199, %p200
      %p202 = scmp.ne.s32.totalorder %s191, %s192
      %p203 = scmp.eq.s32.totalorder %s26, 0
      %p204 = por %p202, %p203
      %p205 = scmp.ne.s32.totalorder %s191, %s192
      %p206 = scmp.eq.s32.totalorder %s27, 1
      %p207 = por %p205, %p206
      %p209 = scmp.ne.s32.totalorder %s192, %s208
      %p210 = scmp.eq.s32.totalorder %s27, 0
      %p211 = por %p209, %p210
      %s212 = ssub.s32 %s21, %s28
      %p213 = scmp.eq.s32.totalorder %s212, 0
      %s215 = sadd.s32 %s214, 1
      %s216 = scalar_select %p213, %s214, %s215
      %p219 = pneg %p213
      %p220 = scmp.eq.s32.totalorder %s21, 1
      %p221 = por %p219, %p220
      %p222 = scmp.ne.s32.totalorder %s214, %s217
      %p223 = scmp.eq.s32.totalorder %s21, 0
      %p224 = por %p222, %p223
      %p225 = scmp.ne.s32.totalorder %s214, %s217
      %p226 = scmp.eq.s32.totalorder %s26, 1
      %p227 = por %p225, %p226
      %p228 = scmp.ne.s32.totalorder %s217, %s218
      %p229 = scmp.eq.s32.totalorder %s26, 0
      %p230 = por %p228, %p229
      %p231 = scmp.ne.s32.totalorder %s217, %s218
      %p232 = scmp.eq.s32.totalorder %s27, 1
      %p233 = por %p231, %p232
      %p235 = scmp.ne.s32.totalorder %s218, %s234
      %p236 = scmp.eq.s32.totalorder %s27, 0
      %p237 = por %p235, %p236
      %p238 = scmp.le.s32.totalorder 1, %s21
      %p239 = scmp.lt.s32.totalorder %s21, 3
      %p240 = pnand %p238, %p239
      %p241 = pneg %p240
      // Predicated region
      $region9: #{tpu_custom_call.1} parent=5 // pred_check
        _
      $region10: #{tpu_custom_call.1} parent=5 // pred_check_branch
        %243 = sbr.rel (%p240) target = $region12
      $region11: #{tpu_custom_call.1} parent=5 // pred_region
        %s244 = ssub.s32 %s21, 1
        // Predicated region
        $region13: #{tpu_custom_call.1} parent=11 // pred_check
          %p245 = pneg %p94
        $region14: #{tpu_custom_call.1} parent=11 // pred_check_branch
          %247 = sbr.rel (%p245) target = $region16
        $region15: #{tpu_custom_call.1} parent=11 // pred_region
          _
        $region16: #{tpu_custom_call.1} parent=11 // pred_fallthru
          _
        // Predicated region
        $region17: #{tpu_custom_call.1} parent=11 // pred_check
          %p248 = pneg %p115
        $region18: #{tpu_custom_call.1} parent=11 // pred_check_branch
          %250 = sbr.rel (%p248) target = $region20
        $region19: #{tpu_custom_call.1} parent=11 // pred_region
          _
        $region20: #{tpu_custom_call.1} parent=11 // pred_fallthru
          _
        // Predicated region
        $region21: #{tpu_custom_call.1} parent=11 // pred_check
          %p251 = pneg %p136
        $region22: #{tpu_custom_call.1} parent=11 // pred_check_branch
          %253 = sbr.rel (%p251) target = $region24
        $region23: #{tpu_custom_call.1} parent=11 // pred_region
          _
        $region24: #{tpu_custom_call.1} parent=11 // pred_fallthru
          _
        // Predicated region
        $region25: #{tpu_custom_call.1} parent=11 // pred_check
          %p254 = pneg %p157
        $region26: #{tpu_custom_call.1} parent=11 // pred_check_branch
          %256 = sbr.rel (%p254) target = $region28
        $region27: #{tpu_custom_call.1} parent=11 // pred_region
          _
        $region28: #{tpu_custom_call.1} parent=11 // pred_fallthru
          _
        // Predicated region
        $region29: #{tpu_custom_call.1} parent=11 // pred_check
          %p257 = pneg %p178
        $region30: #{tpu_custom_call.1} parent=11 // pred_check_branch
          %259 = sbr.rel (%p257) target = $region32
        $region31: #{tpu_custom_call.1} parent=11 // pred_region
          _
        $region32: #{tpu_custom_call.1} parent=11 // pred_fallthru
          _
      $region12: #{tpu_custom_call.1} parent=5 // pred_fallthru
        _
      %p260 = scmp.lt.s32.totalorder %s21, 2
      // Predicated region
      $region33: #{tpu_custom_call.1} parent=5 // pred_check
        %p261 = pneg %p260
      $region34: #{tpu_custom_call.1} parent=5 // pred_check_branch
        %263 = sbr.rel (%p261) target = $region36
      $region35: #{tpu_custom_call.1} parent=5 // pred_region
        // Predicated region
        $region37: #{tpu_custom_call.1} parent=35 // pred_check
          %p264 = pneg %p41
        $region38: #{tpu_custom_call.1} parent=35 // pred_check_branch
          %266 = sbr.rel (%p264) target = $region40
        $region39: #{tpu_custom_call.1} parent=35 // pred_region
          %s267 = sand.u32 %s31, 1
          %s268 = sand.u32 %s31, 1
          %s269 = smul.addr %s268, 16
          %s270 = scalar_lea.vmem [#allocation2], %s269
          %s271 = smul.addr %s21, 8
          %s272 = scalar_lea.vmem %s0, %s271
          // Predicated region
          $region41: #{tpu_custom_call.1} parent=39 // pred_check
            _
          $region42: #{tpu_custom_call.1} parent=39 // pred_check_branch
            %274 = sbr.rel (0) target = $region44
          $region43: #{tpu_custom_call.1} parent=39 // pred_region
            // Predicated region
            $region45: #{tpu_custom_call.1} parent=43 // pred_check
              _
            $region46: #{tpu_custom_call.1} parent=43 // pred_check_branch
              %276 = sbr.rel (0) target = $region48
            $region47: #{tpu_custom_call.1} parent=43 // pred_region
              // Predicated region
              $region60: #{tpu_custom_call.1} parent=47 // pred_check
                _
              $region61: #{tpu_custom_call.1} parent=47 // pred_check_branch
                %293 = sbr.rel (0) target = $region63
              $region62: #{tpu_custom_call.1} parent=47 // pred_region
                loop: start=0, step=1, limit=1
                $region64: #{tpu_custom_call.1} parent=62 // loop_pre_header
                  _
                $region65: #{tpu_custom_call.1} parent=62 // loop_header
                  %s295 = sphi 0, %s299
                  %p296 = scmp.ge.s32.totalorder %s295, 1
                  %s300 = sphi %s272, %s272
                  %s301 = sphi %s270, %s270
                $region66: #{tpu_custom_call.1} parent=62 // loop_header_branch
                  %298 = sbr.rel (%p296) target = $region70
                $region67: #{tpu_custom_call.1} parent=62 // loop_body
                  %v302 = vld [vmem:[%s300] sm:$0xff]
                  %303 = vst [vmem:[%s301] sm:$0xff] %v302
                  %v304 = vld [vmem:[%s300 + $0x10] sm:$0xff]
                  %305 = vst [vmem:[%s301 + $0x8] sm:$0xff] %v304
                $region68: #{tpu_custom_call.1} parent=62 // loop_footer
                  %s299 = sadd.s32 1, %s295
                $region69: #{tpu_custom_call.1} parent=62 // loop_footer_branch
                  %294 = sbr.rel target = $region65
                $region70: #{tpu_custom_call.1} parent=62 // loop_exit
                  _
              $region63: #{tpu_custom_call.1} parent=47 // pred_fallthru
                _
              // Predicated region
              $region71: #{tpu_custom_call.1} parent=47 // pred_check
                _
              $region72: #{tpu_custom_call.1} parent=47 // pred_check_branch
                %307 = sbr.rel target = $region74
              $region73: #{tpu_custom_call.1} parent=47 // pred_region
                _
              $region74: #{tpu_custom_call.1} parent=47 // pred_fallthru
                _
            $region48: #{tpu_custom_call.1} parent=43 // pred_fallthru
              _
            // Predicated region
            $region49: #{tpu_custom_call.1} parent=43 // pred_check
              _
            $region50: #{tpu_custom_call.1} parent=43 // pred_check_branch
              %278 = sbr.rel target = $region52
            $region51: #{tpu_custom_call.1} parent=43 // pred_region
              loop: start=0, step=1, limit=1
              $region53: #{tpu_custom_call.1} parent=51 // loop_pre_header
                _
              $region54: #{tpu_custom_call.1} parent=51 // loop_header
                %s281 = sphi 0, %s285
                %p282 = scmp.ge.s32.totalorder %s281, 1
                %s286 = sphi %s272, %s272
                %s287 = sphi %s270, %s270
              $region55: #{tpu_custom_call.1} parent=51 // loop_header_branch
                %284 = sbr.rel (%p282) target = $region59
              $region56: #{tpu_custom_call.1} parent=51 // loop_body
                %v288 = vld [vmem:[%s286] sm:$0xff]
                %289 = vst [vmem:[%s287] sm:$0xff] %v288
                %v290 = vld [vmem:[%s286 + $0x10] sm:$0xff]
                %291 = vst [vmem:[%s287 + $0x8] sm:$0xff] %v290
              $region57: #{tpu_custom_call.1} parent=51 // loop_footer
                %s285 = sadd.s32 1, %s281
              $region58: #{tpu_custom_call.1} parent=51 // loop_footer_branch
                %280 = sbr.rel target = $region54
              $region59: #{tpu_custom_call.1} parent=51 // loop_exit
                _
            $region52: #{tpu_custom_call.1} parent=43 // pred_fallthru
              _
          $region44: #{tpu_custom_call.1} parent=39 // pred_fallthru
            _
          %308 = vnop
        $region40: #{tpu_custom_call.1} parent=35 // pred_fallthru
          _
        // Predicated region
        $region75: #{tpu_custom_call.1} parent=35 // pred_check
          %p309 = pneg %p67
        $region76: #{tpu_custom_call.1} parent=35 // pred_check_branch
          %311 = sbr.rel (%p309) target = $region78
        $region77: #{tpu_custom_call.1} parent=35 // pred_region
          %p312 = scmp.lt.s32.totalorder %s21, 1
          %s313 = scalar_select %p312, %s21, 1
          %s314 = smul.addr %s313, 8
          %s315 = scalar_lea.vmem %s1, %s314
        $region78: #{tpu_custom_call.1} parent=35 // pred_fallthru
          _
      $region36: #{tpu_custom_call.1} parent=5 // pred_fallthru
        _
      %p316 = scmp.le.s32.totalorder 1, %s21
      %p317 = scmp.lt.s32.totalorder %s21, 3
      %p318 = pnand %p316, %p317
      %p319 = pneg %p318
      // Predicated region
      $region79: #{tpu_custom_call.1} parent=5 // pred_check
        _
      $region80: #{tpu_custom_call.1} parent=5 // pred_check_branch
        %321 = sbr.rel (%p318) target = $region82
      $region81: #{tpu_custom_call.1} parent=5 // pred_region
        %s322 = ssub.s32 %s21, 1
        %s323 = sand.u32 %s34, 1
        %s324 = sand.u32 %s34, 1
        %s325 = smul.addr %s324, 16
        %s326 = scalar_lea.vmem [#allocation2], %s325
        // Predicated region
        $region83: #{tpu_custom_call.1} parent=81 // pred_check
          %p327 = pneg %p47
        $region84: #{tpu_custom_call.1} parent=81 // pred_check_branch
          %329 = sbr.rel (%p327) target = $region86
        $region85: #{tpu_custom_call.1} parent=81 // pred_region
          _
        $region86: #{tpu_custom_call.1} parent=81 // pred_fallthru
          _
        %s330 = sand.u32 %s34, 1
        %s331 = sand.u32 %s34, 1
        %s332 = smul.addr %s331, 16
        %s333 = scalar_lea.vmem [#allocation2], %s332
        %p334 = pneg %p47
        %p335 = pneg %p44
        %p336 = scmp.lt.s32.totalorder %s26, 1
        %s337 = scalar_select %p336, %s26, 1
        %s338 = smul.addr %s337, 8
        %s339 = scalar_lea.vmem %s1, %s338
        %p340 = pneg %p73
        %p341 = pneg %p70
        %p342 = pneg %p94
        %p343 = pneg %p91
        %p344 = pneg %p115
        %p345 = pneg %p112
        %p346 = pneg %p136
        %p347 = pneg %p133
        %p348 = pneg %p157
        %p349 = pneg %p154
        %p350 = pneg %p178
        %p351 = pneg %p175
        %p352 = pneg %p204
        %p353 = pneg %p201
        %s354 = sand.u32 %s191, 1
        %s355 = scalar_lea.sflag [#allocation4], %s354
        %s356 = sand.u32 %s191, 1
        %s357 = smul.addr %s356, 8
        %s358 = scalar_lea.vmem [#allocation3], %s357
        %p359 = pneg %p230
        %p360 = pneg %p227
        %s361 = sand.u32 %s217, 1
        %s362 = scalar_lea.sflag [#allocation6], %s361
        %s363 = sand.u32 %s217, 1
        %s364 = smul.addr %s363, 16
        %s365 = scalar_lea.vmem [#allocation5], %s364
        %p366 = scmp.lt.s32.totalorder %s26, 1
        %s367 = scalar_select %p366, %s26, 1
        %s368 = smul.addr %s367, 8
        %s369 = scalar_lea.vmem %s1, %s368
        %v370 = vld [vmem:[%s326] sm:$0xff]
        %v371 = vld [vmem:[%s326 + $0x8] sm:$0xff]
        %v372 = vld [vmem:[%s369] sm:$0xff]
        %v373 = vld [vmem:[%s6] sm:$0x1]
        %v374 = vld [vmem:[%s6 + $0x1] sm:$0x1]
        %v375 = vld [vmem:[%s6 + $0x2] sm:$0x1]
        %v376 = vld [vmem:[%s2] sm:$0xff]
        %v377 = vld [vmem:[%s2 + $0x8] sm:$0xff]
        %v378 = vld [vmem:[%s2 + $0x10] sm:$0xff]
        %v379 = vld [vmem:[%s2 + $0x18] sm:$0xff]
        %v380 = vld [vmem:[%s2 + $0x20] sm:$0xff]
        %v381 = vld [vmem:[%s2 + $0x28] sm:$0xff]
        %v382 = vld [vmem:[%s2 + $0x30] sm:$0xff]
        %v383 = vld [vmem:[%s2 + $0x38] sm:$0xff]
        %v384 = vld [vmem:[%s2 + $0x40] sm:$0xff]
        %v385 = vld [vmem:[%s2 + $0x48] sm:$0xff]
        %v386 = vld [vmem:[%s2 + $0x50] sm:$0xff]
        %v387 = vld [vmem:[%s2 + $0x58] sm:$0xff]
        %v388 = vld [vmem:[%s2 + $0x60] sm:$0xff]
        %v389 = vld [vmem:[%s2 + $0x68] sm:$0xff]
        %v390 = vld [vmem:[%s2 + $0x70] sm:$0xff]
        %v391 = vld [vmem:[%s2 + $0x78] sm:$0xff]
        %vm392 = vcmask 261120
        %v394 = vsel %vm392, %v370, 0
        %396 = vmatprep.subr.mxu0 0.0
        %397 = vmatpush1.msra.mxu0 %v376
        %398 = vmatprep.subr.mxu0 0.0
        %399 = vmatpush1.msra.mxu0 %v377
        %400 = vmatprep.subr.mxu0 0.0
        %401 = vmatpush1.msra.mxu0 %v378
        %402 = vmatprep.subr.mxu0 0.0
        %403 = vmatpush1.msra.mxu0 %v379
        %404 = vmatprep.subr.mxu0 0.0
        %405 = vmatpush1.msra.mxu0 0.0
        %406 = vmatprep.subr.mxu0 0.0
        %407 = vmatpush1.msra.mxu0 0.0
        %408 = vmatprep.subr.mxu0 0.0
        %409 = vmatpush1.msra.mxu0 0.0
        %410 = vmatprep.subr.mxu0 0.0
        %411 = vmatpush1.msra.mxu0 0.0
        %412 = vmatprep.subr.mxu0 0.0
        %413 = vmatpush1.msra.mxu0 0.0
        %414 = vmatprep.subr.mxu0 0.0
        %415 = vmatpush1.msra.mxu0 0.0
        %416 = vmatprep.subr.mxu0 0.0
        %417 = vmatpush1.msra.mxu0 0.0
        %418 = vmatprep.subr.mxu0 0.0
        %419 = vmatpush1.msra.mxu0 0.0
        %420 = vmatprep.subr.mxu0 0.0
        %421 = vmatpush1.msra.mxu0 0.0
        %422 = vmatprep.subr.mxu0 0.0
        %423 = vmatpush1.msra.mxu0 0.0
        %424 = vmatprep.subr.mxu0 0.0
        %425 = vmatpush1.msra.mxu0 0.0
        %426 = vmatprep.subr.mxu0 0.0
        %427 = vmatpush1.msra.mxu0 0.0
        %428 = vmatprep.subr.mxu0 0.0
        %429 = vmatpush1.msra.mxu0 0.0
        %430 = vmatprep.subr.mxu0 0.0
        %431 = vmatpush1.msra.mxu0 0.0
        %432 = vmatprep.subr.mxu0 0.0
        %433 = vmatpush1.msra.mxu0 0.0
        %434 = vmatprep.subr.mxu0 0.0
        %435 = vmatpush1.msra.mxu0 0.0
        %436 = vmatprep.subr.mxu0 0.0
        %437 = vmatpush1.msra.mxu0 0.0
        %438 = vmatprep.subr.mxu0 0.0
        %439 = vmatpush1.msra.mxu0 0.0
        %440 = vmatprep.subr.mxu0 0.0
        %441 = vmatpush1.msra.mxu0 0.0
        %442 = vmatprep.subr.mxu0 0.0
        %443 = vmatpush1.msra.mxu0 0.0
        %444 = vmatprep.subr.mxu0 0.0
        %445 = vmatpush1.msra.mxu0 0.0
        %446 = vmatprep.subr.mxu0 0.0
        %447 = vmatpush1.msra.mxu0 0.0
        %448 = vmatprep.subr.mxu0 0.0
        %449 = vmatpush1.msra.mxu0 0.0
        %450 = vmatprep.subr.mxu0 0.0
        %451 = vmatpush1.msra.mxu0 0.0
        %452 = vmatprep.subr.mxu0 0.0
        %453 = vmatpush1.msra.mxu0 0.0
        %454 = vmatprep.subr.mxu0 0.0
        %455 = vmatpush1.msra.mxu0 0.0
        %456 = vmatprep.subr.mxu0 0.0
        %457 = vmatpush1.msra.mxu0 0.0
        %458 = vmatprep.subr.mxu0 0.0
        %459 = vmatpush1.msra.mxu0 0.0
        %460 = vmatprep.mubr.f32.mxu0 0.0
        %461 = vmatmul.mubr.f32.gmra.mrb[0].mxu0 %v394
        %v462 = vpop.f32.mrb[0].mxu0
        %v463 = vadd.f32 0.0, %v462
        %v464 = vpop.f32.mrb[0].mxu0
        %465 = vdwg.mxu0
        %466 = vmatprep.subr.mxu0 0.0
        %467 = vmatpush1.msra.mxu0 %v380
        %468 = vmatprep.subr.mxu0 0.0
        %469 = vmatpush1.msra.mxu0 %v381
        %470 = vmatprep.subr.mxu0 0.0
        %471 = vmatpush1.msra.mxu0 %v382
        %472 = vmatprep.subr.mxu0 0.0
        %473 = vmatpush1.msra.mxu0 %v383
        %474 = vmatprep.subr.mxu0 0.0
        %475 = vmatpush1.msra.mxu0 0.0
        %476 = vmatprep.subr.mxu0 0.0
        %477 = vmatpush1.msra.mxu0 0.0
        %478 = vmatprep.subr.mxu0 0.0
        %479 = vmatpush1.msra.mxu0 0.0
        %480 = vmatprep.subr.mxu0 0.0
        %481 = vmatpush1.msra.mxu0 0.0
        %482 = vmatprep.subr.mxu0 0.0
        %483 = vmatpush1.msra.mxu0 0.0
        %484 = vmatprep.subr.mxu0 0.0
        %485 = vmatpush1.msra.mxu0 0.0
        %486 = vmatprep.subr.mxu0 0.0
        %487 = vmatpush1.msra.mxu0 0.0
        %488 = vmatprep.subr.mxu0 0.0
        %489 = vmatpush1.msra.mxu0 0.0
        %490 = vmatprep.subr.mxu0 0.0
        %491 = vmatpush1.msra.mxu0 0.0
        %492 = vmatprep.subr.mxu0 0.0
        %493 = vmatpush1.msra.mxu0 0.0
        %494 = vmatprep.subr.mxu0 0.0
        %495 = vmatpush1.msra.mxu0 0.0
        %496 = vmatprep.subr.mxu0 0.0
        %497 = vmatpush1.msra.mxu0 0.0
        %498 = vmatprep.subr.mxu0 0.0
        %499 = vmatpush1.msra.mxu0 0.0
        %500 = vmatprep.subr.mxu0 0.0
        %501 = vmatpush1.msra.mxu0 0.0
        %502 = vmatprep.subr.mxu0 0.0
        %503 = vmatpush1.msra.mxu0 0.0
        %504 = vmatprep.subr.mxu0 0.0
        %505 = vmatpush1.msra.mxu0 0.0
        %506 = vmatprep.subr.mxu0 0.0
        %507 = vmatpush1.msra.mxu0 0.0
        %508 = vmatprep.subr.mxu0 0.0
        %509 = vmatpush1.msra.mxu0 0.0
        %510 = vmatprep.subr.mxu0 0.0
        %511 = vmatpush1.msra.mxu0 0.0
        %512 = vmatprep.subr.mxu0 0.0
        %513 = vmatpush1.msra.mxu0 0.0
        %514 = vmatprep.subr.mxu0 0.0
        %515 = vmatpush1.msra.mxu0 0.0
        %516 = vmatprep.subr.mxu0 0.0
        %517 = vmatpush1.msra.mxu0 0.0
        %518 = vmatprep.subr.mxu0 0.0
        %519 = vmatpush1.msra.mxu0 0.0
        %520 = vmatprep.subr.mxu0 0.0
        %521 = vmatpush1.msra.mxu0 0.0
        %522 = vmatprep.subr.mxu0 0.0
        %523 = vmatpush1.msra.mxu0 0.0
        %524 = vmatprep.subr.mxu0 0.0
        %525 = vmatpush1.msra.mxu0 0.0
        %526 = vmatprep.subr.mxu0 0.0
        %527 = vmatpush1.msra.mxu0 0.0
        %528 = vmatprep.subr.mxu0 0.0
        %529 = vmatpush1.msra.mxu0 0.0
        %530 = vmatprep.mubr.f32.mxu0 0.0
        %531 = vmatmul.mubr.f32.gmra.mrb[0].mxu0 %v394
        %v532 = vpop.f32.mrb[0].mxu0
        %v533 = vadd.f32 0.0, %v532
        %v534 = vpop.f32.mrb[0].mxu0
        %535 = vdwg.mxu0
        %v537 = vsel %vm392, %v371, 0
        %539 = vmatprep.subr.mxu0 0.0
        %540 = vmatpush1.msra.mxu0 %v384
        %541 = vmatprep.subr.mxu0 0.0
        %542 = vmatpush1.msra.mxu0 %v385
        %543 = vmatprep.subr.mxu0 0.0
        %544 = vmatpush1.msra.mxu0 %v386
        %545 = vmatprep.subr.mxu0 0.0
        %546 = vmatpush1.msra.mxu0 %v387
        %547 = vmatprep.subr.mxu0 0.0
        %548 = vmatpush1.msra.mxu0 0.0
        %549 = vmatprep.subr.mxu0 0.0
        %550 = vmatpush1.msra.mxu0 0.0
        %551 = vmatprep.subr.mxu0 0.0
        %552 = vmatpush1.msra.mxu0 0.0
        %553 = vmatprep.subr.mxu0 0.0
        %554 = vmatpush1.msra.mxu0 0.0
        %555 = vmatprep.subr.mxu0 0.0
        %556 = vmatpush1.msra.mxu0 0.0
        %557 = vmatprep.subr.mxu0 0.0
        %558 = vmatpush1.msra.mxu0 0.0
        %559 = vmatprep.subr.mxu0 0.0
        %560 = vmatpush1.msra.mxu0 0.0
        %561 = vmatprep.subr.mxu0 0.0
        %562 = vmatpush1.msra.mxu0 0.0
        %563 = vmatprep.subr.mxu0 0.0
        %564 = vmatpush1.msra.mxu0 0.0
        %565 = vmatprep.subr.mxu0 0.0
        %566 = vmatpush1.msra.mxu0 0.0
        %567 = vmatprep.subr.mxu0 0.0
        %568 = vmatpush1.msra.mxu0 0.0
        %569 = vmatprep.subr.mxu0 0.0
        %570 = vmatpush1.msra.mxu0 0.0
        %571 = vmatprep.subr.mxu0 0.0
        %572 = vmatpush1.msra.mxu0 0.0
        %573 = vmatprep.subr.mxu0 0.0
        %574 = vmatpush1.msra.mxu0 0.0
        %575 = vmatprep.subr.mxu0 0.0
        %576 = vmatpush1.msra.mxu0 0.0
        %577 = vmatprep.subr.mxu0 0.0
        %578 = vmatpush1.msra.mxu0 0.0
        %579 = vmatprep.subr.mxu0 0.0
        %580 = vmatpush1.msra.mxu0 0.0
        %581 = vmatprep.subr.mxu0 0.0
        %582 = vmatpush1.msra.mxu0 0.0
        %583 = vmatprep.subr.mxu0 0.0
        %584 = vmatpush1.msra.mxu0 0.0
        %585 = vmatprep.subr.mxu0 0.0
        %586 = vmatpush1.msra.mxu0 0.0
        %587 = vmatprep.subr.mxu0 0.0
        %588 = vmatpush1.msra.mxu0 0.0
        %589 = vmatprep.subr.mxu0 0.0
        %590 = vmatpush1.msra.mxu0 0.0
        %591 = vmatprep.subr.mxu0 0.0
        %592 = vmatpush1.msra.mxu0 0.0
        %593 = vmatprep.subr.mxu0 0.0
        %594 = vmatpush1.msra.mxu0 0.0
        %595 = vmatprep.subr.mxu0 0.0
        %596 = vmatpush1.msra.mxu0 0.0
        %597 = vmatprep.subr.mxu0 0.0
        %598 = vmatpush1.msra.mxu0 0.0
        %599 = vmatprep.subr.mxu0 0.0
        %600 = vmatpush1.msra.mxu0 0.0
        %601 = vmatprep.subr.mxu0 0.0
        %602 = vmatpush1.msra.mxu0 0.0
        %603 = vmatprep.mubr.f32.mxu0 0.0
        %604 = vmatmul.mubr.f32.gmra.mrb[0].mxu0 %v537
        %v605 = vpop.f32.mrb[0].mxu0
        %v606 = vadd.f32 0.0, %v605
        %v607 = vpop.f32.mrb[0].mxu0
        %608 = vdwg.mxu0
        %609 = vmatprep.subr.mxu0 0.0
        %610 = vmatpush1.msra.mxu0 %v388
        %611 = vmatprep.subr.mxu0 0.0
        %612 = vmatpush1.msra.mxu0 %v389
        %613 = vmatprep.subr.mxu0 0.0
        %614 = vmatpush1.msra.mxu0 %v390
        %615 = vmatprep.subr.mxu0 0.0
        %616 = vmatpush1.msra.mxu0 %v391
        %617 = vmatprep.subr.mxu0 0.0
        %618 = vmatpush1.msra.mxu0 0.0
        %619 = vmatprep.subr.mxu0 0.0
        %620 = vmatpush1.msra.mxu0 0.0
        %621 = vmatprep.subr.mxu0 0.0
        %622 = vmatpush1.msra.mxu0 0.0
        %623 = vmatprep.subr.mxu0 0.0
        %624 = vmatpush1.msra.mxu0 0.0
        %625 = vmatprep.subr.mxu0 0.0
        %626 = vmatpush1.msra.mxu0 0.0
        %627 = vmatprep.subr.mxu0 0.0
        %628 = vmatpush1.msra.mxu0 0.0
        %629 = vmatprep.subr.mxu0 0.0
        %630 = vmatpush1.msra.mxu0 0.0
        %631 = vmatprep.subr.mxu0 0.0
        %632 = vmatpush1.msra.mxu0 0.0
        %633 = vmatprep.subr.mxu0 0.0
        %634 = vmatpush1.msra.mxu0 0.0
        %635 = vmatprep.subr.mxu0 0.0
        %636 = vmatpush1.msra.mxu0 0.0
        %637 = vmatprep.subr.mxu0 0.0
        %638 = vmatpush1.msra.mxu0 0.0
        %639 = vmatprep.subr.mxu0 0.0
        %640 = vmatpush1.msra.mxu0 0.0
        %641 = vmatprep.subr.mxu0 0.0
        %642 = vmatpush1.msra.mxu0 0.0
        %643 = vmatprep.subr.mxu0 0.0
        %644 = vmatpush1.msra.mxu0 0.0
        %645 = vmatprep.subr.mxu0 0.0
        %646 = vmatpush1.msra.mxu0 0.0
        %647 = vmatprep.subr.mxu0 0.0
        %648 = vmatpush1.msra.mxu0 0.0
        %649 = vmatprep.subr.mxu0 0.0
        %650 = vmatpush1.msra.mxu0 0.0
        %651 = vmatprep.subr.mxu0 0.0
        %652 = vmatpush1.msra.mxu0 0.0
        %653 = vmatprep.subr.mxu0 0.0
        %654 = vmatpush1.msra.mxu0 0.0
        %655 = vmatprep.subr.mxu0 0.0
        %656 = vmatpush1.msra.mxu0 0.0
        %657 = vmatprep.subr.mxu0 0.0
        %658 = vmatpush1.msra.mxu0 0.0
        %659 = vmatprep.subr.mxu0 0.0
        %660 = vmatpush1.msra.mxu0 0.0
        %661 = vmatprep.subr.mxu0 0.0
        %662 = vmatpush1.msra.mxu0 0.0
        %663 = vmatprep.subr.mxu0 0.0
        %664 = vmatpush1.msra.mxu0 0.0
        %665 = vmatprep.subr.mxu0 0.0
        %666 = vmatpush1.msra.mxu0 0.0
        %667 = vmatprep.subr.mxu0 0.0
        %668 = vmatpush1.msra.mxu0 0.0
        %669 = vmatprep.subr.mxu0 0.0
        %670 = vmatpush1.msra.mxu0 0.0
        %671 = vmatprep.subr.mxu0 0.0
        %672 = vmatpush1.msra.mxu0 0.0
        %673 = vmatprep.mubr.f32.mxu0 0.0
        %674 = vmatmul.mubr.f32.gmra.mrb[0].mxu0 %v537
        %v675 = vpop.f32.mrb[0].mxu0
        %v676 = vadd.f32 0.0, %v675
        %v677 = vpop.f32.mrb[0].mxu0
        %678 = vdwg.mxu0
        %v679 = vld [vmem:[%s3] sm:$0xff]
        %v680 = vld [vmem:[%s3 + $0x8] sm:$0xff]
        %v681 = vld [vmem:[%s3 + $0x10] sm:$0xff]
        %v682 = vld [vmem:[%s3 + $0x18] sm:$0xff]
        %v683 = vld [vmem:[%s3 + $0x20] sm:$0xff]
        %v684 = vld [vmem:[%s3 + $0x28] sm:$0xff]
        %v685 = vld [vmem:[%s3 + $0x30] sm:$0xff]
        %v686 = vld [vmem:[%s3 + $0x38] sm:$0xff]
        %v688 = vsel %vm392, %v372, 0
        %690 = vmatprep.subr.mxu0 0.0
        %691 = vmatpush1.msra.mxu0 %v679
        %692 = vmatprep.subr.mxu0 0.0
        %693 = vmatpush1.msra.mxu0 %v680
        %694 = vmatprep.subr.mxu0 0.0
        %695 = vmatpush1.msra.mxu0 %v681
        %696 = vmatprep.subr.mxu0 0.0
        %697 = vmatpush1.msra.mxu0 %v682
        %698 = vmatprep.subr.mxu0 0.0
        %699 = vmatpush1.msra.mxu0 0.0
        %700 = vmatprep.subr.mxu0 0.0
        %701 = vmatpush1.msra.mxu0 0.0
        %702 = vmatprep.subr.mxu0 0.0
        %703 = vmatpush1.msra.mxu0 0.0
        %704 = vmatprep.subr.mxu0 0.0
        %705 = vmatpush1.msra.mxu0 0.0
        %706 = vmatprep.subr.mxu0 0.0
        %707 = vmatpush1.msra.mxu0 0.0
        %708 = vmatprep.subr.mxu0 0.0
        %709 = vmatpush1.msra.mxu0 0.0
        %710 = vmatprep.subr.mxu0 0.0
        %711 = vmatpush1.msra.mxu0 0.0
        %712 = vmatprep.subr.mxu0 0.0
        %713 = vmatpush1.msra.mxu0 0.0
        %714 = vmatprep.subr.mxu0 0.0
        %715 = vmatpush1.msra.mxu0 0.0
        %716 = vmatprep.subr.mxu0 0.0
        %717 = vmatpush1.msra.mxu0 0.0
        %718 = vmatprep.subr.mxu0 0.0
        %719 = vmatpush1.msra.mxu0 0.0
        %720 = vmatprep.subr.mxu0 0.0
        %721 = vmatpush1.msra.mxu0 0.0
        %722 = vmatprep.subr.mxu0 0.0
        %723 = vmatpush1.msra.mxu0 0.0
        %724 = vmatprep.subr.mxu0 0.0
        %725 = vmatpush1.msra.mxu0 0.0
        %726 = vmatprep.subr.mxu0 0.0
        %727 = vmatpush1.msra.mxu0 0.0
        %728 = vmatprep.subr.mxu0 0.0
        %729 = vmatpush1.msra.mxu0 0.0
        %730 = vmatprep.subr.mxu0 0.0
        %731 = vmatpush1.msra.mxu0 0.0
        %732 = vmatprep.subr.mxu0 0.0
        %733 = vmatpush1.msra.mxu0 0.0
        %734 = vmatprep.subr.mxu0 0.0
        %735 = vmatpush1.msra.mxu0 0.0
        %736 = vmatprep.subr.mxu0 0.0
        %737 = vmatpush1.msra.mxu0 0.0
        %738 = vmatprep.subr.mxu0 0.0
        %739 = vmatpush1.msra.mxu0 0.0
        %740 = vmatprep.subr.mxu0 0.0
        %741 = vmatpush1.msra.mxu0 0.0
        %742 = vmatprep.subr.mxu0 0.0
        %743 = vmatpush1.msra.mxu0 0.0
        %744 = vmatprep.subr.mxu0 0.0
        %745 = vmatpush1.msra.mxu0 0.0
        %746 = vmatprep.subr.mxu0 0.0
        %747 = vmatpush1.msra.mxu0 0.0
        %748 = vmatprep.subr.mxu0 0.0
        %749 = vmatpush1.msra.mxu0 0.0
        %750 = vmatprep.subr.mxu0 0.0
        %751 = vmatpush1.msra.mxu0 0.0
        %752 = vmatprep.subr.mxu0 0.0
        %753 = vmatpush1.msra.mxu0 0.0
        %754 = vmatprep.mubr.f32.mxu0 0.0
        %755 = vmatmul.mubr.f32.gmra.mrb[0].mxu0 %v688
        %v756 = vpop.f32.mrb[0].mxu0
        %v757 = vadd.f32 0.0, %v756
        %v758 = vpop.f32.mrb[0].mxu0
        %759 = vdwg.mxu0
        %760 = vmatprep.subr.mxu0 0.0
        %761 = vmatpush1.msra.mxu0 %v683
        %762 = vmatprep.subr.mxu0 0.0
        %763 = vmatpush1.msra.mxu0 %v684
        %764 = vmatprep.subr.mxu0 0.0
        %765 = vmatpush1.msra.mxu0 %v685
        %766 = vmatprep.subr.mxu0 0.0
        %767 = vmatpush1.msra.mxu0 %v686
        %768 = vmatprep.subr.mxu0 0.0
        %769 = vmatpush1.msra.mxu0 0.0
        %770 = vmatprep.subr.mxu0 0.0
        %771 = vmatpush1.msra.mxu0 0.0
        %772 = vmatprep.subr.mxu0 0.0
        %773 = vmatpush1.msra.mxu0 0.0
        %774 = vmatprep.subr.mxu0 0.0
        %775 = vmatpush1.msra.mxu0 0.0
        %776 = vmatprep.subr.mxu0 0.0
        %777 = vmatpush1.msra.mxu0 0.0
        %778 = vmatprep.subr.mxu0 0.0
        %779 = vmatpush1.msra.mxu0 0.0
        %780 = vmatprep.subr.mxu0 0.0
        %781 = vmatpush1.msra.mxu0 0.0
        %782 = vmatprep.subr.mxu0 0.0
        %783 = vmatpush1.msra.mxu0 0.0
        %784 = vmatprep.subr.mxu0 0.0
        %785 = vmatpush1.msra.mxu0 0.0
        %786 = vmatprep.subr.mxu0 0.0
        %787 = vmatpush1.msra.mxu0 0.0
        %788 = vmatprep.subr.mxu0 0.0
        %789 = vmatpush1.msra.mxu0 0.0
        %790 = vmatprep.subr.mxu0 0.0
        %791 = vmatpush1.msra.mxu0 0.0
        %792 = vmatprep.subr.mxu0 0.0
        %793 = vmatpush1.msra.mxu0 0.0
        %794 = vmatprep.subr.mxu0 0.0
        %795 = vmatpush1.msra.mxu0 0.0
        %796 = vmatprep.subr.mxu0 0.0
        %797 = vmatpush1.msra.mxu0 0.0
        %798 = vmatprep.subr.mxu0 0.0
        %799 = vmatpush1.msra.mxu0 0.0
        %800 = vmatprep.subr.mxu0 0.0
        %801 = vmatpush1.msra.mxu0 0.0
        %802 = vmatprep.subr.mxu0 0.0
        %803 = vmatpush1.msra.mxu0 0.0
        %804 = vmatprep.subr.mxu0 0.0
        %805 = vmatpush1.msra.mxu0 0.0
        %806 = vmatprep.subr.mxu0 0.0
        %807 = vmatpush1.msra.mxu0 0.0
        %808 = vmatprep.subr.mxu0 0.0
        %809 = vmatpush1.msra.mxu0 0.0
        %810 = vmatprep.subr.mxu0 0.0
        %811 = vmatpush1.msra.mxu0 0.0
        %812 = vmatprep.subr.mxu0 0.0
        %813 = vmatpush1.msra.mxu0 0.0
        %814 = vmatprep.subr.mxu0 0.0
        %815 = vmatpush1.msra.mxu0 0.0
        %816 = vmatprep.subr.mxu0 0.0
        %817 = vmatpush1.msra.mxu0 0.0
        %818 = vmatprep.subr.mxu0 0.0
        %819 = vmatpush1.msra.mxu0 0.0
        %820 = vmatprep.subr.mxu0 0.0
        %821 = vmatpush1.msra.mxu0 0.0
        %822 = vmatprep.subr.mxu0 0.0
        %823 = vmatpush1.msra.mxu0 0.0
        %824 = vmatprep.mubr.f32.mxu0 0.0
        %825 = vmatmul.mubr.f32.gmra.mrb[0].mxu0 %v688
        %v826 = vpop.f32.mrb[0].mxu0
        %v827 = vadd.f32 0.0, %v826
        %v828 = vpop.f32.mrb[0].mxu0
        %829 = vdwg.mxu0
        %vm830 = vcmask 130048
        %v832 = vsel %vm830, %v757, 0
        %v835 = vsel %vm830, %v463, 0
        %837 = vmatprep.subr.mxu0 0.0
        %838 = vmatpush1.xpose.msra.mxu0 %v835
        %839 = vmatprep.subr.mxu0 0.0
        %840 = vmatpush1.xpose.msra.mxu0 0.0
        %841 = vmatprep.subr.mxu0 0.0
        %842 = vmatpush1.xpose.msra.mxu0 0.0
        %843 = vmatprep.subr.mxu0 0.0
        %844 = vmatpush1.xpose.msra.mxu0 0.0
        %845 = vmatprep.subr.mxu0 0.0
        %846 = vmatpush1.xpose.msra.mxu0 0.0
        %847 = vmatprep.subr.mxu0 0.0
        %848 = vmatpush1.xpose.msra.mxu0 0.0
        %849 = vmatprep.subr.mxu0 0.0
        %850 = vmatpush1.xpose.msra.mxu0 0.0
        %851 = vmatprep.subr.mxu0 0.0
        %852 = vmatpush1.xpose.msra.mxu0 0.0
        %853 = vmatprep.subr.mxu0 0.0
        %854 = vmatpush1.xpose.msra.mxu0 0.0
        %855 = vmatprep.subr.mxu0 0.0
        %856 = vmatpush1.xpose.msra.mxu0 0.0
        %857 = vmatprep.subr.mxu0 0.0
        %858 = vmatpush1.xpose.msra.mxu0 0.0
        %859 = vmatprep.subr.mxu0 0.0
        %860 = vmatpush1.xpose.msra.mxu0 0.0
        %861 = vmatprep.subr.mxu0 0.0
        %862 = vmatpush1.xpose.msra.mxu0 0.0
        %863 = vmatprep.subr.mxu0 0.0
        %864 = vmatpush1.xpose.msra.mxu0 0.0
        %865 = vmatprep.subr.mxu0 0.0
        %866 = vmatpush1.xpose.msra.mxu0 0.0
        %867 = vmatprep.subr.mxu0 0.0
        %868 = vmatpush1.xpose.msra.mxu0 0.0
        %869 = vmatprep.subr.mxu0 0.0
        %870 = vmatpush1.xpose.msra.mxu0 0.0
        %871 = vmatprep.subr.mxu0 0.0
        %872 = vmatpush1.xpose.msra.mxu0 0.0
        %873 = vmatprep.subr.mxu0 0.0
        %874 = vmatpush1.xpose.msra.mxu0 0.0
        %875 = vmatprep.subr.mxu0 0.0
        %876 = vmatpush1.xpose.msra.mxu0 0.0
        %877 = vmatprep.subr.mxu0 0.0
        %878 = vmatpush1.xpose.msra.mxu0 0.0
        %879 = vmatprep.subr.mxu0 0.0
        %880 = vmatpush1.xpose.msra.mxu0 0.0
        %881 = vmatprep.subr.mxu0 0.0
        %882 = vmatpush1.xpose.msra.mxu0 0.0
        %883 = vmatprep.subr.mxu0 0.0
        %884 = vmatpush1.xpose.msra.mxu0 0.0
        %885 = vmatprep.subr.mxu0 0.0
        %886 = vmatpush1.xpose.msra.mxu0 0.0
        %887 = vmatprep.subr.mxu0 0.0
        %888 = vmatpush1.xpose.msra.mxu0 0.0
        %889 = vmatprep.subr.mxu0 0.0
        %890 = vmatpush1.xpose.msra.mxu0 0.0
        %891 = vmatprep.subr.mxu0 0.0
        %892 = vmatpush1.xpose.msra.mxu0 0.0
        %893 = vmatprep.subr.mxu0 0.0
        %894 = vmatpush1.xpose.msra.mxu0 0.0
        %895 = vmatprep.subr.mxu0 0.0
        %896 = vmatpush1.xpose.msra.mxu0 0.0
        %897 = vmatprep.subr.mxu0 0.0
        %898 = vmatpush1.xpose.msra.mxu0 0.0
        %899 = vmatprep.subr.mxu0 0.0
        %900 = vmatpush1.xpose.msra.mxu0 0.0
        %901 = vmatprep.mubr.f32.mxu0 0.0
        %902 = vmatmul.mubr.f32.gmra.mrb[0].mxu0 %v832
        %v903 = vpop.f32.mrb[0].mxu0
        %v904 = vadd.f32 0.0, %v903
        %v905 = vpop.f32.mrb[0].mxu0
        %906 = vdwg.mxu0
        %v908 = vsel %vm830, %v827, 0
        %v911 = vsel %vm830, %v533, 0
        %913 = vmatprep.subr.mxu0 0.0
        %914 = vmatpush1.xpose.msra.mxu0 %v911
        %915 = vmatprep.subr.mxu0 0.0
        %916 = vmatpush1.xpose.msra.mxu0 0.0
        %917 = vmatprep.subr.mxu0 0.0
        %918 = vmatpush1.xpose.msra.mxu0 0.0
        %919 = vmatprep.subr.mxu0 0.0
        %920 = vmatpush1.xpose.msra.mxu0 0.0
        %921 = vmatprep.subr.mxu0 0.0
        %922 = vmatpush1.xpose.msra.mxu0 0.0
        %923 = vmatprep.subr.mxu0 0.0
        %924 = vmatpush1.xpose.msra.mxu0 0.0
        %925 = vmatprep.subr.mxu0 0.0
        %926 = vmatpush1.xpose.msra.mxu0 0.0
        %927 = vmatprep.subr.mxu0 0.0
        %928 = vmatpush1.xpose.msra.mxu0 0.0
        %929 = vmatprep.subr.mxu0 0.0
        %930 = vmatpush1.xpose.msra.mxu0 0.0
        %931 = vmatprep.subr.mxu0 0.0
        %932 = vmatpush1.xpose.msra.mxu0 0.0
        %933 = vmatprep.subr.mxu0 0.0
        %934 = vmatpush1.xpose.msra.mxu0 0.0
        %935 = vmatprep.subr.mxu0 0.0
        %936 = vmatpush1.xpose.msra.mxu0 0.0
        %937 = vmatprep.subr.mxu0 0.0
        %938 = vmatpush1.xpose.msra.mxu0 0.0
        %939 = vmatprep.subr.mxu0 0.0
        %940 = vmatpush1.xpose.msra.mxu0 0.0
        %941 = vmatprep.subr.mxu0 0.0
        %942 = vmatpush1.xpose.msra.mxu0 0.0
        %943 = vmatprep.subr.mxu0 0.0
        %944 = vmatpush1.xpose.msra.mxu0 0.0
        %945 = vmatprep.subr.mxu0 0.0
        %946 = vmatpush1.xpose.msra.mxu0 0.0
        %947 = vmatprep.subr.mxu0 0.0
        %948 = vmatpush1.xpose.msra.mxu0 0.0
        %949 = vmatprep.subr.mxu0 0.0
        %950 = vmatpush1.xpose.msra.mxu0 0.0
        %951 = vmatprep.subr.mxu0 0.0
        %952 = vmatpush1.xpose.msra.mxu0 0.0
        %953 = vmatprep.subr.mxu0 0.0
        %954 = vmatpush1.xpose.msra.mxu0 0.0
        %955 = vmatprep.subr.mxu0 0.0
        %956 = vmatpush1.xpose.msra.mxu0 0.0
        %957 = vmatprep.subr.mxu0 0.0
        %958 = vmatpush1.xpose.msra.mxu0 0.0
        %959 = vmatprep.subr.mxu0 0.0
        %960 = vmatpush1.xpose.msra.mxu0 0.0
        %961 = vmatprep.subr.mxu0 0.0
        %962 = vmatpush1.xpose.msra.mxu0 0.0
        %963 = vmatprep.subr.mxu0 0.0
        %964 = vmatpush1.xpose.msra.mxu0 0.0
        %965 = vmatprep.subr.mxu0 0.0
        %966 = vmatpush1.xpose.msra.mxu0 0.0
        %967 = vmatprep.subr.mxu0 0.0
        %968 = vmatpush1.xpose.msra.mxu0 0.0
        %969 = vmatprep.subr.mxu0 0.0
        %970 = vmatpush1.xpose.msra.mxu0 0.0
        %971 = vmatprep.subr.mxu0 0.0
        %972 = vmatpush1.xpose.msra.mxu0 0.0
        %973 = vmatprep.subr.mxu0 0.0
        %974 = vmatpush1.xpose.msra.mxu0 0.0
        %975 = vmatprep.subr.mxu0 0.0
        %976 = vmatpush1.xpose.msra.mxu0 0.0
        %977 = vmatprep.mubr.f32.mxu0 0.0
        %978 = vmatmul.mubr.f32.gmra.mrb[0].mxu0 %v908
        %v979 = vpop.f32.mrb[0].mxu0
        %v980 = vadd.f32 0.0, %v979
        %v981 = vpop.f32.mrb[0].mxu0
        %982 = vdwg.mxu0
        %vm983 = vcmask 64512
        %v984 = vsel %vm983, %v904, -inf
        %985 = vmax.xlane.f32.xlu0 %v984
        %v986 = vpop.xlane.xlu0 %985
        %v987 = vsel %vm983, %v980, -inf
        %988 = vmax.xlane.f32.xlu0 %v987
        %v989 = vpop.xlane.xlu0 %988
        %v990 = vsub.f32 %v904, %v986
        %v991 = vsub.f32 %v980, %v989
        %v992 = vmul.f32 %v990, 1.442695
        %v993 = vpow.pop %v992
        %v994 = vmul.f32 %v991, 1.442695
        %v995 = vpow.pop %v994
        %v996 = vsel %vm983, %v993, 0.0
        %997 = vadd.xlane.f32.xlu0 %v996
        %v998 = vpop.xlane.xlu0 %997
        %v999 = vsel %vm983, %v995, 0.0
        %1000 = vadd.xlane.f32.xlu0 %v999
        %v1001 = vpop.xlane.xlu0 %1000
        %v1002 = vrcp.pop %v998
        %v1003 = vrcp.pop %v1001
        %v1004 = vmul.f32 %v998, %v1002
        %v1005 = vmul.f32 %v1001, %v1003
        %v1006 = vsub.f32 2.0, %v1004
        %v1007 = vsub.f32 2.0, %v1005
        %v1008 = vmul.f32 %v1002, %v1006
        %v1009 = vmul.f32 %v1003, %v1007
        %v1010 = vmul.f32 %v993, %v1008
        %v1011 = vmul.f32 %v995, %v1009
        %1012 = vst.msk [vmem:[%s365] sm:$0xff] %vm983, %v1010
        %1013 = vst.msk [vmem:[%s365 + $0x8] sm:$0xff] %vm983, %v1011
        %v1015 = vsel %vm983, %v1010, 0
        %1017 = vmatprep.subr.mxu0 0.0
        %1018 = vmatpush1.msra.mxu0 %v606
        %1019 = vmatprep.subr.mxu0 0.0
        %1020 = vmatpush1.msra.mxu0 0.0
        %1021 = vmatprep.subr.mxu0 0.0
        %1022 = vmatpush1.msra.mxu0 0.0
        %1023 = vmatprep.subr.mxu0 0.0
        %1024 = vmatpush1.msra.mxu0 0.0
        %1025 = vmatprep.subr.mxu0 0.0
        %1026 = vmatpush1.msra.mxu0 0.0
        %1027 = vmatprep.subr.mxu0 0.0
        %1028 = vmatpush1.msra.mxu0 0.0
        %1029 = vmatprep.subr.mxu0 0.0
        %1030 = vmatpush1.msra.mxu0 0.0
        %1031 = vmatprep.subr.mxu0 0.0
        %1032 = vmatpush1.msra.mxu0 0.0
        %1033 = vmatprep.subr.mxu0 0.0
        %1034 = vmatpush1.msra.mxu0 0.0
        %1035 = vmatprep.subr.mxu0 0.0
        %1036 = vmatpush1.msra.mxu0 0.0
        %1037 = vmatprep.subr.mxu0 0.0
        %1038 = vmatpush1.msra.mxu0 0.0
        %1039 = vmatprep.subr.mxu0 0.0
        %1040 = vmatpush1.msra.mxu0 0.0
        %1041 = vmatprep.subr.mxu0 0.0
        %1042 = vmatpush1.msra.mxu0 0.0
        %1043 = vmatprep.subr.mxu0 0.0
        %1044 = vmatpush1.msra.mxu0 0.0
        %1045 = vmatprep.subr.mxu0 0.0
        %1046 = vmatpush1.msra.mxu0 0.0
        %1047 = vmatprep.subr.mxu0 0.0
        %1048 = vmatpush1.msra.mxu0 0.0
        %1049 = vmatprep.subr.mxu0 0.0
        %1050 = vmatpush1.msra.mxu0 0.0
        %1051 = vmatprep.subr.mxu0 0.0
        %1052 = vmatpush1.msra.mxu0 0.0
        %1053 = vmatprep.subr.mxu0 0.0
        %1054 = vmatpush1.msra.mxu0 0.0
        %1055 = vmatprep.subr.mxu0 0.0
        %1056 = vmatpush1.msra.mxu0 0.0
        %1057 = vmatprep.subr.mxu0 0.0
        %1058 = vmatpush1.msra.mxu0 0.0
        %1059 = vmatprep.subr.mxu0 0.0
        %1060 = vmatpush1.msra.mxu0 0.0
        %1061 = vmatprep.subr.mxu0 0.0
        %1062 = vmatpush1.msra.mxu0 0.0
        %1063 = vmatprep.subr.mxu0 0.0
        %1064 = vmatpush1.msra.mxu0 0.0
        %1065 = vmatprep.subr.mxu0 0.0
        %1066 = vmatpush1.msra.mxu0 0.0
        %1067 = vmatprep.subr.mxu0 0.0
        %1068 = vmatpush1.msra.mxu0 0.0
        %1069 = vmatprep.subr.mxu0 0.0
        %1070 = vmatpush1.msra.mxu0 0.0
        %1071 = vmatprep.subr.mxu0 0.0
        %1072 = vmatpush1.msra.mxu0 0.0
        %1073 = vmatprep.subr.mxu0 0.0
        %1074 = vmatpush1.msra.mxu0 0.0
        %1075 = vmatprep.subr.mxu0 0.0
        %1076 = vmatpush1.msra.mxu0 0.0
        %1077 = vmatprep.subr.mxu0 0.0
        %1078 = vmatpush1.msra.mxu0 0.0
        %1079 = vmatprep.subr.mxu0 0.0
        %1080 = vmatpush1.msra.mxu0 0.0
        %1081 = vmatprep.mubr.f32.mxu0 0.0
        %1082 = vmatmul.mubr.f32.gmra.mrb[0].mxu0 %v1015
        %v1083 = vpop.f32.mrb[0].mxu0
        %v1084 = vadd.f32 0.0, %v1083
        %v1085 = vpop.f32.mrb[0].mxu0
        %1086 = vdwg.mxu0
        %v1088 = vsel %vm983, %v1011, 0
        %1090 = vmatprep.subr.mxu0 0.0
        %1091 = vmatpush1.msra.mxu0 %v676
        %1092 = vmatprep.subr.mxu0 0.0
        %1093 = vmatpush1.msra.mxu0 0.0
        %1094 = vmatprep.subr.mxu0 0.0
        %1095 = vmatpush1.msra.mxu0 0.0
        %1096 = vmatprep.subr.mxu0 0.0
        %1097 = vmatpush1.msra.mxu0 0.0
        %1098 = vmatprep.subr.mxu0 0.0
        %1099 = vmatpush1.msra.mxu0 0.0
        %1100 = vmatprep.subr.mxu0 0.0
        %1101 = vmatpush1.msra.mxu0 0.0
        %1102 = vmatprep.subr.mxu0 0.0
        %1103 = vmatpush1.msra.mxu0 0.0
        %1104 = vmatprep.subr.mxu0 0.0
        %1105 = vmatpush1.msra.mxu0 0.0
        %1106 = vmatprep.subr.mxu0 0.0
        %1107 = vmatpush1.msra.mxu0 0.0
        %1108 = vmatprep.subr.mxu0 0.0
        %1109 = vmatpush1.msra.mxu0 0.0
        %1110 = vmatprep.subr.mxu0 0.0
        %1111 = vmatpush1.msra.mxu0 0.0
        %1112 = vmatprep.subr.mxu0 0.0
        %1113 = vmatpush1.msra.mxu0 0.0
        %1114 = vmatprep.subr.mxu0 0.0
        %1115 = vmatpush1.msra.mxu0 0.0
        %1116 = vmatprep.subr.mxu0 0.0
        %1117 = vmatpush1.msra.mxu0 0.0
        %1118 = vmatprep.subr.mxu0 0.0
        %1119 = vmatpush1.msra.mxu0 0.0
        %1120 = vmatprep.subr.mxu0 0.0
        %1121 = vmatpush1.msra.mxu0 0.0
        %1122 = vmatprep.subr.mxu0 0.0
        %1123 = vmatpush1.msra.mxu0 0.0
        %1124 = vmatprep.subr.mxu0 0.0
        %1125 = vmatpush1.msra.mxu0 0.0
        %1126 = vmatprep.subr.mxu0 0.0
        %1127 = vmatpush1.msra.mxu0 0.0
        %1128 = vmatprep.subr.mxu0 0.0
        %1129 = vmatpush1.msra.mxu0 0.0
        %1130 = vmatprep.subr.mxu0 0.0
        %1131 = vmatpush1.msra.mxu0 0.0
        %1132 = vmatprep.subr.mxu0 0.0
        %1133 = vmatpush1.msra.mxu0 0.0
        %1134 = vmatprep.subr.mxu0 0.0
        %1135 = vmatpush1.msra.mxu0 0.0
        %1136 = vmatprep.subr.mxu0 0.0
        %1137 = vmatpush1.msra.mxu0 0.0
        %1138 = vmatprep.subr.mxu0 0.0
        %1139 = vmatpush1.msra.mxu0 0.0
        %1140 = vmatprep.subr.mxu0 0.0
        %1141 = vmatpush1.msra.mxu0 0.0
        %1142 = vmatprep.subr.mxu0 0.0
        %1143 = vmatpush1.msra.mxu0 0.0
        %1144 = vmatprep.subr.mxu0 0.0
        %1145 = vmatpush1.msra.mxu0 0.0
        %1146 = vmatprep.subr.mxu0 0.0
        %1147 = vmatpush1.msra.mxu0 0.0
        %1148 = vmatprep.subr.mxu0 0.0
        %1149 = vmatpush1.msra.mxu0 0.0
        %1150 = vmatprep.subr.mxu0 0.0
        %1151 = vmatpush1.msra.mxu0 0.0
        %1152 = vmatprep.subr.mxu0 0.0
        %1153 = vmatpush1.msra.mxu0 0.0
        %1154 = vmatprep.mubr.f32.mxu0 0.0
        %1155 = vmatmul.mubr.f32.gmra.mrb[0].mxu0 %v1088
        %v1156 = vpop.f32.mrb[0].mxu0
        %v1157 = vadd.f32 0.0, %v1156
        %v1158 = vpop.f32.mrb[0].mxu0
        %1159 = vdwg.mxu0
        %v1160 = vld [vmem:[%s5] sm:$0xff]
        %v1161 = vld [vmem:[%s5 + $0x8] sm:$0xff]
        %v1162 = vld [vmem:[%s5 + $0x10] sm:$0xff]
        %v1163 = vld [vmem:[%s5 + $0x18] sm:$0xff]
        %v1165 = vsel %vm830, %v1084, 0
        %1167 = vmatprep.subr.mxu0 0.0
        %1168 = vmatpush1.msra.mxu0 %v1160
        %1169 = vmatprep.subr.mxu0 0.0
        %1170 = vmatpush1.msra.mxu0 %v1161
        %1171 = vmatprep.subr.mxu0 0.0
        %1172 = vmatpush1.msra.mxu0 0.0
        %1173 = vmatprep.subr.mxu0 0.0
        %1174 = vmatpush1.msra.mxu0 0.0
        %1175 = vmatprep.subr.mxu0 0.0
        %1176 = vmatpush1.msra.mxu0 0.0
        %1177 = vmatprep.subr.mxu0 0.0
        %1178 = vmatpush1.msra.mxu0 0.0
        %1179 = vmatprep.subr.mxu0 0.0
        %1180 = vmatpush1.msra.mxu0 0.0
        %1181 = vmatprep.subr.mxu0 0.0
        %1182 = vmatpush1.msra.mxu0 0.0
        %1183 = vmatprep.subr.mxu0 0.0
        %1184 = vmatpush1.msra.mxu0 0.0
        %1185 = vmatprep.subr.mxu0 0.0
        %1186 = vmatpush1.msra.mxu0 0.0
        %1187 = vmatprep.subr.mxu0 0.0
        %1188 = vmatpush1.msra.mxu0 0.0
        %1189 = vmatprep.subr.mxu0 0.0
        %1190 = vmatpush1.msra.mxu0 0.0
        %1191 = vmatprep.subr.mxu0 0.0
        %1192 = vmatpush1.msra.mxu0 0.0
        %1193 = vmatprep.subr.mxu0 0.0
        %1194 = vmatpush1.msra.mxu0 0.0
        %1195 = vmatprep.subr.mxu0 0.0
        %1196 = vmatpush1.msra.mxu0 0.0
        %1197 = vmatprep.subr.mxu0 0.0
        %1198 = vmatpush1.msra.mxu0 0.0
        %1199 = vmatprep.subr.mxu0 0.0
        %1200 = vmatpush1.msra.mxu0 0.0
        %1201 = vmatprep.subr.mxu0 0.0
        %1202 = vmatpush1.msra.mxu0 0.0
        %1203 = vmatprep.subr.mxu0 0.0
        %1204 = vmatpush1.msra.mxu0 0.0
        %1205 = vmatprep.subr.mxu0 0.0
        %1206 = vmatpush1.msra.mxu0 0.0
        %1207 = vmatprep.subr.mxu0 0.0
        %1208 = vmatpush1.msra.mxu0 0.0
        %1209 = vmatprep.subr.mxu0 0.0
        %1210 = vmatpush1.msra.mxu0 0.0
        %1211 = vmatprep.subr.mxu0 0.0
        %1212 = vmatpush1.msra.mxu0 0.0
        %1213 = vmatprep.subr.mxu0 0.0
        %1214 = vmatpush1.msra.mxu0 0.0
        %1215 = vmatprep.subr.mxu0 0.0
        %1216 = vmatpush1.msra.mxu0 0.0
        %1217 = vmatprep.subr.mxu0 0.0
        %1218 = vmatpush1.msra.mxu0 0.0
        %1219 = vmatprep.subr.mxu0 0.0
        %1220 = vmatpush1.msra.mxu0 0.0
        %1221 = vmatprep.subr.mxu0 0.0
        %1222 = vmatpush1.msra.mxu0 0.0
        %1223 = vmatprep.subr.mxu0 0.0
        %1224 = vmatpush1.msra.mxu0 0.0
        %1225 = vmatprep.subr.mxu0 0.0
        %1226 = vmatpush1.msra.mxu0 0.0
        %1227 = vmatprep.subr.mxu0 0.0
        %1228 = vmatpush1.msra.mxu0 0.0
        %1229 = vmatprep.subr.mxu0 0.0
        %1230 = vmatpush1.msra.mxu0 0.0
        %1231 = vmatprep.mubr.f32.mxu0 0.0
        %1232 = vmatmul.mubr.f32.gmra.mrb[0].mxu0 %v1165
        %v1233 = vpop.f32.mrb[0].mxu0
        %v1234 = vadd.f32 0.0, %v1233
        %v1235 = vpop.f32.mrb[0].mxu0
        %1236 = vdwg.mxu0
        %v1238 = vsel %vm830, %v1157, 0
        %1240 = vmatprep.subr.mxu0 0.0
        %1241 = vmatpush1.msra.mxu0 %v1162
        %1242 = vmatprep.subr.mxu0 0.0
        %1243 = vmatpush1.msra.mxu0 %v1163
        %1244 = vmatprep.subr.mxu0 0.0
        %1245 = vmatpush1.msra.mxu0 0.0
        %1246 = vmatprep.subr.mxu0 0.0
        %1247 = vmatpush1.msra.mxu0 0.0
        %1248 = vmatprep.subr.mxu0 0.0
        %1249 = vmatpush1.msra.mxu0 0.0
        %1250 = vmatprep.subr.mxu0 0.0
        %1251 = vmatpush1.msra.mxu0 0.0
        %1252 = vmatprep.subr.mxu0 0.0
        %1253 = vmatpush1.msra.mxu0 0.0
        %1254 = vmatprep.subr.mxu0 0.0
        %1255 = vmatpush1.msra.mxu0 0.0
        %1256 = vmatprep.subr.mxu0 0.0
        %1257 = vmatpush1.msra.mxu0 0.0
        %1258 = vmatprep.subr.mxu0 0.0
        %1259 = vmatpush1.msra.mxu0 0.0
        %1260 = vmatprep.subr.mxu0 0.0
        %1261 = vmatpush1.msra.mxu0 0.0
        %1262 = vmatprep.subr.mxu0 0.0
        %1263 = vmatpush1.msra.mxu0 0.0
        %1264 = vmatprep.subr.mxu0 0.0
        %1265 = vmatpush1.msra.mxu0 0.0
        %1266 = vmatprep.subr.mxu0 0.0
        %1267 = vmatpush1.msra.mxu0 0.0
        %1268 = vmatprep.subr.mxu0 0.0
        %1269 = vmatpush1.msra.mxu0 0.0
        %1270 = vmatprep.subr.mxu0 0.0
        %1271 = vmatpush1.msra.mxu0 0.0
        %1272 = vmatprep.subr.mxu0 0.0
        %1273 = vmatpush1.msra.mxu0 0.0
        %1274 = vmatprep.subr.mxu0 0.0
        %1275 = vmatpush1.msra.mxu0 0.0
        %1276 = vmatprep.subr.mxu0 0.0
        %1277 = vmatpush1.msra.mxu0 0.0
        %1278 = vmatprep.subr.mxu0 0.0
        %1279 = vmatpush1.msra.mxu0 0.0
        %1280 = vmatprep.subr.mxu0 0.0
        %1281 = vmatpush1.msra.mxu0 0.0
        %1282 = vmatprep.subr.mxu0 0.0
        %1283 = vmatpush1.msra.mxu0 0.0
        %1284 = vmatprep.subr.mxu0 0.0
        %1285 = vmatpush1.msra.mxu0 0.0
        %1286 = vmatprep.subr.mxu0 0.0
        %1287 = vmatpush1.msra.mxu0 0.0
        %1288 = vmatprep.subr.mxu0 0.0
        %1289 = vmatpush1.msra.mxu0 0.0
        %1290 = vmatprep.subr.mxu0 0.0
        %1291 = vmatpush1.msra.mxu0 0.0
        %1292 = vmatprep.subr.mxu0 0.0
        %1293 = vmatpush1.msra.mxu0 0.0
        %1294 = vmatprep.subr.mxu0 0.0
        %1295 = vmatpush1.msra.mxu0 0.0
        %1296 = vmatprep.subr.mxu0 0.0
        %1297 = vmatpush1.msra.mxu0 0.0
        %1298 = vmatprep.subr.mxu0 0.0
        %1299 = vmatpush1.msra.mxu0 0.0
        %1300 = vmatprep.subr.mxu0 0.0
        %1301 = vmatpush1.msra.mxu0 0.0
        %1302 = vmatprep.subr.mxu0 0.0
        %1303 = vmatpush1.msra.mxu0 0.0
        %1304 = vmatprep.mubr.f32.mxu0 0.0
        %1305 = vmatmul.mubr.f32.gmra.mrb[0].mxu0 %v1238
        %v1306 = vpop.f32.mrb[0].mxu0
        %v1307 = vadd.f32 0.0, %v1306
        %v1308 = vpop.f32.mrb[0].mxu0
        %1309 = vdwg.mxu0
        %v1310 = vld [vmem:[%s4] sm:$0xff]
        %v1311 = vld [vmem:[%s4 + $0x8] sm:$0xff]
        %v1312 = vld [vmem:[%s4 + $0x10] sm:$0xff]
        %v1313 = vld [vmem:[%s4 + $0x18] sm:$0xff]
        %v1314 = vsel %vm392, %v1234, 0.0
        %v1315 = vsel %vm392, %v1307, 0.0
        %v1316 = vadd.f32 %v1314, %v1315
        %1317 = vmatprep.subr.mxu0 0.0
        %1318 = vmatpush1.msra.mxu0 %v1310
        %1319 = vmatprep.subr.mxu0 0.0
        %1320 = vmatpush1.msra.mxu0 %v1311
        %1321 = vmatprep.subr.mxu0 0.0
        %1322 = vmatpush1.msra.mxu0 %v1312
        %1323 = vmatprep.subr.mxu0 0.0
        %1324 = vmatpush1.msra.mxu0 %v1313
        %1325 = vmatprep.subr.mxu0 0.0
        %1326 = vmatpush1.msra.mxu0 0.0
        %1327 = vmatprep.subr.mxu0 0.0
        %1328 = vmatpush1.msra.mxu0 0.0
        %1329 = vmatprep.subr.mxu0 0.0
        %1330 = vmatpush1.msra.mxu0 0.0
        %1331 = vmatprep.subr.mxu0 0.0
        %1332 = vmatpush1.msra.mxu0 0.0
        %1333 = vmatprep.subr.mxu0 0.0
        %1334 = vmatpush1.msra.mxu0 0.0
        %1335 = vmatprep.subr.mxu0 0.0
        %1336 = vmatpush1.msra.mxu0 0.0
        %1337 = vmatprep.subr.mxu0 0.0
        %1338 = vmatpush1.msra.mxu0 0.0
        %1339 = vmatprep.subr.mxu0 0.0
        %1340 = vmatpush1.msra.mxu0 0.0
        %1341 = vmatprep.subr.mxu0 0.0
        %1342 = vmatpush1.msra.mxu0 0.0
        %1343 = vmatprep.subr.mxu0 0.0
        %1344 = vmatpush1.msra.mxu0 0.0
        %1345 = vmatprep.subr.mxu0 0.0
        %1346 = vmatpush1.msra.mxu0 0.0
        %1347 = vmatprep.subr.mxu0 0.0
        %1348 = vmatpush1.msra.mxu0 0.0
        %1349 = vmatprep.subr.mxu0 0.0
        %1350 = vmatpush1.msra.mxu0 0.0
        %1351 = vmatprep.subr.mxu0 0.0
        %1352 = vmatpush1.msra.mxu0 0.0
        %1353 = vmatprep.subr.mxu0 0.0
        %1354 = vmatpush1.msra.mxu0 0.0
        %1355 = vmatprep.subr.mxu0 0.0
        %1356 = vmatpush1.msra.mxu0 0.0
        %1357 = vmatprep.subr.mxu0 0.0
        %1358 = vmatpush1.msra.mxu0 0.0
        %1359 = vmatprep.subr.mxu0 0.0
        %1360 = vmatpush1.msra.mxu0 0.0
        %1361 = vmatprep.subr.mxu0 0.0
        %1362 = vmatpush1.msra.mxu0 0.0
        %1363 = vmatprep.subr.mxu0 0.0
        %1364 = vmatpush1.msra.mxu0 0.0
        %1365 = vmatprep.subr.mxu0 0.0
        %1366 = vmatpush1.msra.mxu0 0.0
        %1367 = vmatprep.subr.mxu0 0.0
        %1368 = vmatpush1.msra.mxu0 0.0
        %1369 = vmatprep.subr.mxu0 0.0
        %1370 = vmatpush1.msra.mxu0 0.0
        %1371 = vmatprep.subr.mxu0 0.0
        %1372 = vmatpush1.msra.mxu0 0.0
        %1373 = vmatprep.subr.mxu0 0.0
        %1374 = vmatpush1.msra.mxu0 0.0
        %1375 = vmatprep.subr.mxu0 0.0
        %1376 = vmatpush1.msra.mxu0 0.0
        %1377 = vmatprep.subr.mxu0 0.0
        %1378 = vmatpush1.msra.mxu0 0.0
        %1379 = vmatprep.subr.mxu0 0.0
        %1380 = vmatpush1.msra.mxu0 0.0
        %1381 = vmatprep.mubr.f32.mxu0 0.0
        %1382 = vmatmul.mubr.f32.gmra.mrb[0].mxu0 %v688
        %v1383 = vpop.f32.mrb[0].mxu0
        %v1384 = vadd.f32 %v1316, %v1383
        %v1385 = vpop.f32.mrb[0].mxu0
        %1386 = vdwg.mxu0
        %v1387 = vlaneseq
        %v1388 = vshrl.u32 %v1387, 7
        %v1389 = vsub.s32 0, %v1388
        %v1390 = vrot.slane %v373, %v1389
        %v1391 = vadd.f32 %v1384, %v1390
        %v1392 = vadd.f32 %v1391, %v372
        %v1393 = vsel %vm392, %v1392, 0.0
        %1394 = vadd.xlane.f32.xlu0 %v1393
        %v1395 = vpop.xlane.xlu0 %1394
        %v1396 = vrcp.pop 32.0
        %v1397 = vmul.f32 %v1395, %v1396
        %v1398 = vsub.f32 %v1392, %v1397
        %v1399 = vmul.f32 %v1398, %v1398
        %v1400 = vsel %vm392, %v1399, 0.0
        %1401 = vadd.xlane.f32.xlu0 %v1400
        %v1402 = vpop.xlane.xlu0 %1401
        %v1403 = vmul.f32 %v1402, %v1396
        %v1404 = vadd.f32 %v1403, 1e-05
        %v1405 = vrsqrt.pop %v1404
        %v1406 = vmul.f32 %v1398, %v1405
        %v1407 = vlaneseq
        %v1408 = vshrl.u32 %v1407, 7
        %v1409 = vsub.s32 0, %v1408
        %v1410 = vrot.slane %v374, %v1409
        %v1411 = vmul.f32 %v1406, %v1410
        %v1412 = vlaneseq
        %v1413 = vshrl.u32 %v1412, 7
        %v1414 = vsub.s32 0, %v1413
        %v1415 = vrot.slane %v375, %v1414
        %v1416 = vadd.f32 %v1411, %v1415
        %1417 = vst.msk [vmem:[%s358] sm:$0xff] %vm392, %v1416
        %s1418 = sand.u32 %s191, 1
        %s1419 = scalar_lea.sflag [#allocation4], %s1418
        %s1420 = sand.u32 %s191, 1
        %s1421 = smul.addr %s1420, 8
        %s1422 = scalar_lea.vmem [#allocation3], %s1421
        %s1423 = sand.u32 %s217, 1
        %s1424 = scalar_lea.sflag [#allocation6], %s1423
        %s1425 = sand.u32 %s217, 1
        %s1426 = smul.addr %s1425, 16
        %s1427 = scalar_lea.vmem [#allocation5], %s1426
        // Predicated region
        $region87: #{tpu_custom_call.1} parent=81 // pred_check
          %p1428 = pneg %p201
        $region88: #{tpu_custom_call.1} parent=81 // pred_check_branch
          %1430 = sbr.rel (%p1428) target = $region90
        $region89: #{tpu_custom_call.1} parent=81 // pred_region
          %s1432 = ssub.s32 128, 128
          %1433 = vsyncadd %s1419, %s1432
          %s1434 = smul.addr %s26, 128
          %s1435 = scalar_lea.hbm %s7, %s1434
          %s1437 = sshll.u32 %s1422, 4
          %s1438 = int_to_ptr.vmem [resolvable:$true] %s1437
          %1440 = dma.vmem_to_hbm [thread:$0]  %s1438, 128, %s1435, %s1419
        $region90: #{tpu_custom_call.1} parent=81 // pred_fallthru
          _
        // Predicated region
        $region91: #{tpu_custom_call.1} parent=81 // pred_check
          %p1441 = pneg %p227
        $region92: #{tpu_custom_call.1} parent=81 // pred_check_branch
          %1443 = sbr.rel (%p1441) target = $region94
        $region93: #{tpu_custom_call.1} parent=81 // pred_region
          %s1445 = ssub.s32 256, 256
          %1446 = vsyncadd %s1424, %s1445
          %s1447 = smul.addr %s26, 128
          %s1448 = scalar_lea.hbm %s8, %s1447
          %s1449 = sshll.u32 %s1427, 4
          %s1450 = int_to_ptr.vmem [resolvable:$true] %s1449
          %1455 = dma.vmem_to_hbm [thread:$0]  %s1450, 256, %s1448, %s1424, 128, 256, 8
        $region94: #{tpu_custom_call.1} parent=81 // pred_fallthru
          _
      $region82: #{tpu_custom_call.1} parent=5 // pred_fallthru
        _
      %p1456 = scmp.le.s32.totalorder 2, %s21
      // Predicated region
      $region95: #{tpu_custom_call.1} parent=5 // pred_check
        %p1457 = pneg %p1456
      $region96: #{tpu_custom_call.1} parent=5 // pred_check_branch
        %1459 = sbr.rel (%p1457) target = $region98
      $region97: #{tpu_custom_call.1} parent=5 // pred_region
        %s1460 = ssub.s32 %s21, 2
        // Predicated region
        $region99: #{tpu_custom_call.1} parent=97 // pred_check
          %p1461 = pneg %p207
        $region100: #{tpu_custom_call.1} parent=97 // pred_check_branch
          %1463 = sbr.rel (%p1461) target = $region102
        $region101: #{tpu_custom_call.1} parent=97 // pred_region
          %s1464 = sand.u32 %s192, 1
          %s1465 = scalar_lea.sflag [#allocation4], %s1464
          %s1466 = sand.u32 %s192, 1
          %s1467 = smul.addr %s1466, 8
          %s1468 = scalar_lea.vmem [#allocation3], %s1467
          %1469 = dma.done %s1465, 128
        $region102: #{tpu_custom_call.1} parent=97 // pred_fallthru
          _
        // Predicated region
        $region103: #{tpu_custom_call.1} parent=97 // pred_check
          %p1470 = pneg %p233
        $region104: #{tpu_custom_call.1} parent=97 // pred_check_branch
          %1472 = sbr.rel (%p1470) target = $region106
        $region105: #{tpu_custom_call.1} parent=97 // pred_region
          %s1473 = sand.u32 %s218, 1
          %s1474 = scalar_lea.sflag [#allocation6], %s1473
          %s1475 = sand.u32 %s218, 1
          %s1476 = smul.addr %s1475, 16
          %s1477 = scalar_lea.vmem [#allocation5], %s1476
          %1478 = dma.done %s1474, 256
        $region106: #{tpu_custom_call.1} parent=97 // pred_fallthru
          _
      $region98: #{tpu_custom_call.1} parent=5 // pred_fallthru
        _
    $region6: #{tpu_custom_call.1} parent=1 // loop_footer
      %s25 = sadd.s32 1, %s21
    $region7: #{tpu_custom_call.1} parent=1 // loop_footer_branch
      %20 = sbr.rel target = $region3
    $region8: #{tpu_custom_call.1} parent=1 // loop_exit
      _
    %1479 = vsyncpa [#allocation4], 1
    %s1480 = scalar_lea.sflag [#allocation4], 1
    %1481 = vsyncpa %s1480, 1
    %1482 = vsyncpa [#allocation6], 1
    %s1483 = scalar_lea.sflag [#allocation6], 1
    %1484 = vsyncpa %s1483, 1

</llo_original>
